<compile_context>
chip_gen: v7x
topology: tpu7x:2x2x1
jax: 0.10.0
libtpu: 0.0.40
codegen_flags: <defaults>
</compile_context>

<pallas_src>
import jax
import jax.numpy as jnp
from jax.experimental import pallas as pl
from jax.experimental.pallas import tpu as pltpu


def _round_up(n, m):
    return ((n + m - 1) // m) * m


def _cdiv(a, b):
    return (a + b - 1) // b


def _vmem_budget_bytes():
    """VMEM budget usable by this kernel (~25% headroom left for Mosaic)."""
    cap = 64 << 20  # conservative default = v7x physical per-TC VMEM
    try:
        info = pltpu.get_tpu_info()
        cap = int(getattr(info, "vmem_capacity_bytes", cap))
    except Exception:
        pass
    return min((cap * 3) // 4, 100 << 20)


# ----------------------------------------------------------------------------
# Kernels
# ----------------------------------------------------------------------------
def ffn_resident_kernel(x_ref, w1_ref, b1_ref, w2_ref, b2_ref, o_ref):
    # x_ref  : (tm, Dp)  bf16 row tile
    # w1_ref : (Dp, Fp)  bf16, resident across all row tiles
    # b1_ref : (1, Fp)   f32
    # w2_ref : (Fp, Dp)  bf16, resident across all row tiles
    # b2_ref : (1, Dp)   f32
    # o_ref  : (tm, Dp)
    h = jnp.dot(x_ref[...], w1_ref[...], preferred_element_type=jnp.float32)
    h = jnp.maximum(h + b1_ref[...], 0.0)
    o = jnp.dot(h.astype(w2_ref.dtype), w2_ref[...],
                preferred_element_type=jnp.float32)
    o_ref[...] = (o + b2_ref[...]).astype(o_ref.dtype)


def ffn_chunked_kernel(x_ref, w1_ref, b1_ref, w2_ref, b2_ref, o_ref, acc_ref):
    # Grid: (row tiles [parallel], d_ff chunks [arbitrary, reduction]).
    # acc_ref: (tm, Dp) f32 VMEM scratch accumulating GEMM-2 over d_ff chunks.
    j = pl.program_id(1)

    h = jnp.dot(x_ref[...], w1_ref[...], preferred_element_type=jnp.float32)
    h = jnp.maximum(h + b1_ref[...], 0.0)
    contrib = jnp.dot(h.astype(w2_ref.dtype), w2_ref[...],
                      preferred_element_type=jnp.float32)

    @pl.when(j == 0)
    def _():
        acc_ref[...] = contrib            # direct write: no zero-init pass

    @pl.when(j > 0)
    def _():
        acc_ref[...] += contrib

    @pl.when(j == pl.num_programs(1) - 1)
    def _():
        o_ref[...] = (acc_ref[...] + b2_ref[...]).astype(o_ref.dtype)


# ----------------------------------------------------------------------------
# Config / tiling selection
# ----------------------------------------------------------------------------
def _pick_config(M, Dp, Fp, x_el, w_el, out_el, budget, *,
                 force_chunked=False, max_tf=None):
    def clamp_tm(tm):
        tm = max(16, min(tm, _round_up(M, 16)))
        # keep >= 2 row tiles when M allows (v7x 2-TC megacore sharding)
        if _cdiv(M, tm) < 2 and M > 16:
            tm = _round_up(_cdiv(M, 2), 16)
        return tm

    def resident_fits(tm):
        wb = 2 * Dp * Fp * w_el                          # W1 + W2, single-buffered
        bias = (Fp + Dp) * 4
        xio = 2 * tm * Dp * x_el + 2 * tm * Dp * out_el  # dbl-buffered x / out
        h = tm * Fp * (4 + w_el)                         # f32 h + bf16 copy
        return wb + bias + xio + h <= budget

    def chunked_fits(tm, tf):
        wb = 2 * 2 * Dp * tf * w_el                      # dbl-buffered W1/W2 chunks
        bias = 2 * (tf + Dp) * 4
        xio = 2 * tm * Dp * x_el + 2 * tm * Dp * out_el
        acc = tm * Dp * 4
        h = tm * tf * (4 + w_el)
        return wb + bias + xio + acc + h <= budget

    tm_candidates = (1024, 512, 256, 128, 64, 32, 16)
    if not force_chunked:
        for tm in tm_candidates:
            tm = clamp_tm(tm)
            if resident_fits(tm):
                return "resident", tm, Fp

    tf_candidates = tuple(t for t in (1024, 512, 256, 128)
                          if max_tf is None or t <= max_tf)
    for tm in tm_candidates:
        tmc = clamp_tm(tm)
        for tf in tf_candidates:
            if tf <= Fp and Fp % tf == 0 and chunked_fits(tmc, tf):
                return "chunked", tmc, tf
    return "chunked", 16, 128  # last resort; always fits


# ----------------------------------------------------------------------------
# Parameter preparation (hoisted out of the hot path)
# ----------------------------------------------------------------------------
def prepare_ffn_params(w1, b1, w2, b2, *, weight_dtype=jnp.bfloat16):
    """Cast + pad weights ONCE.

    Weights are stored [in_features, out_features] so the kernel computes
    x @ W (equivalent to PyTorch's x @ W.T with W of shape [out, in]).
    d_model and d_ff are padded up to multiples of 128 (lane-dense tiles).
    """
    d_model, d_ff = w1.shape
    assert w2.shape == (d_ff, d_model)
    Dp = _round_up(d_model, 128)
    Fp = _round_up(d_ff, 128)
    w1p = jnp.pad(w1.astype(weight_dtype), ((0, Dp - d_model), (0, Fp - d_ff)))
    w2p = jnp.pad(w2.astype(weight_dtype), ((0, Fp - d_ff), (0, Dp - d_model)))
    b1p = jnp.pad(b1.astype(jnp.float32).reshape(1, d_ff),
                  ((0, 0), (0, Fp - d_ff)))
    b2p = jnp.pad(b2.astype(jnp.float32).reshape(1, d_model),
                  ((0, 0), (0, Dp - d_model)))
    return {"w1": w1p, "b1": b1p, "w2": w2p, "b2": b2p}


# ----------------------------------------------------------------------------
# Forward wrapper
# ----------------------------------------------------------------------------
def positionwise_feedforward(x, params, *, out_dtype=None,
                             force_chunked=False, max_tf=None):
    """fc2(relu(fc1(x))) for x: [..., d_model] -> [..., d_model]."""
    w1, b1, w2, b2 = params["w1"], params["b1"], params["w2"], params["b2"]
    *lead, d_model = x.shape
    Dp, Fp = w1.shape
    out_dtype = out_dtype or x.dtype
    out_el = jnp.dtype(out_dtype).itemsize
    w_el = jnp.dtype(w1.dtype).itemsize
    x_el = 2  # activations are cast to bf16 for the MXU

    M = 1
    for d in lead:
        M *= d

    budget = _vmem_budget_bytes()
    mode, tm, tf = _pick_config(M, Dp, Fp, x_el, w_el, out_el, budget,
                                force_chunked=force_chunked, max_tf=max_tf)

    M_pad = _round_up(M, tm)
    x2d = x.reshape(M, d_model).astype(jnp.bfloat16)
    if M_pad != M or Dp != d_model:
        x2d = jnp.pad(x2d, ((0, M_pad - M), (0, Dp - d_model)))

    n_row_tiles = M_pad // tm
    flops = 4 * M_pad * Dp * Fp
    w_bytes = (w1.size + w2.size) * w_el
    io_bytes = (x2d.size * x_el + b1.size * 4 + b2.size * 4
                + M_pad * Dp * out_el)

    if mode == "resident":
        grid = (n_row_tiles,)
        in_specs = [
            pl.BlockSpec((tm, Dp), lambda i: (i, 0)),   # x rows
            pl.BlockSpec((Dp, Fp), lambda i: (0, 0)),   # W1 (resident, one DMA)
            pl.BlockSpec((1, Fp), lambda i: (0, 0)),    # b1
            pl.BlockSpec((Fp, Dp), lambda i: (0, 0)),   # W2 (resident, one DMA)
            pl.BlockSpec((1, Dp), lambda i: (0, 0)),    # b2
        ]
        out_spec = pl.BlockSpec((tm, Dp), lambda i: (i, 0))
        scratch = []
        kernel = ffn_resident_kernel
        dim_sem = ("parallel",)
        bytes_accessed = io_bytes + w_bytes
    else:
        grid = (n_row_tiles, Fp // tf)
        in_specs = [
            pl.BlockSpec((tm, Dp), lambda i, j: (i, 0)),   # x rows
            pl.BlockSpec((Dp, tf), lambda i, j: (0, j)),   # W1 chunk
            pl.BlockSpec((1, tf), lambda i, j: (0, j)),    # b1 chunk
            pl.BlockSpec((tf, Dp), lambda i, j: (j, 0)),   # W2 chunk
            pl.BlockSpec((1, Dp), lambda i, j: (0, 0)),    # b2
        ]
        out_spec = pl.BlockSpec((tm, Dp), lambda i, j: (i, 0))
        scratch = [pltpu.VMEM((tm, Dp), jnp.float32)]
        kernel = ffn_chunked_kernel
        dim_sem = ("parallel", "arbitrary")
        # weights are re-streamed once per row tile in this path
        bytes_accessed = io_bytes + w_bytes * n_row_tiles

    out2d = pl.pallas_call(
        kernel,
        out_shape=jax.ShapeDtypeStruct((M_pad, Dp), out_dtype),
        grid_spec=pltpu.PrefetchScalarGridSpec(
            num_scalar_prefetch=0,
            grid=grid,
            in_specs=in_specs,
            out_specs=out_spec,
            scratch_shapes=scratch,
        ),
        compiler_params=pltpu.CompilerParams(
            dimension_semantics=dim_sem,
            vmem_limit_bytes=budget,
        ),
        cost_estimate=pl.CostEstimate(
            flops=flops, transcendentals=0, bytes_accessed=bytes_accessed),
    )(x2d, w1, b1, w2, b2)

    return out2d[:M, :d_model].reshape(*lead, d_model)


def init_params(key, d_model, d_ff, dtype=jnp.float32):
    """Deterministic init mimicking nn.Linear default (uniform +-1/sqrt(fan_in))."""
    k1, k2, k3, k4 = jax.random.split(key, 4)
    bound1 = 1.0 / (d_model ** 0.5)
    bound2 = 1.0 / (d_ff ** 0.5)
    # Stored as [in, out] so the kernel does x @ W (== torch x @ W.T).
    w1 = jax.random.uniform(k1, (d_model, d_ff), dtype, -bound1, bound1)
    b1 = jax.random.uniform(k2, (d_ff,), dtype, -bound1, bound1)
    w2 = jax.random.uniform(k3, (d_ff, d_model), dtype, -bound2, bound2)
    b2 = jax.random.uniform(k4, (d_model,), dtype, -bound2, bound2)
    return w1, b1, w2, b2


if __name__ == "__main__":
    # Small shapes consistent with the module's forward [batch, seq, d_model].
    # S=120 -> M=240 (ragged rows, exercises row padding + 2 row tiles);
    # the forced-chunked run with max_tf=256 exercises the d_ff accumulator.
    B, S = 2, 120
    d_model, d_ff = 256, 512

    key = jax.random.PRNGKey(0)
    kx, kp = jax.random.split(key)
    x = jax.random.normal(kx, (B, S, d_model), jnp.float32)
    w1, b1, w2, b2 = init_params(kp, d_model, d_ff)

    params = prepare_ffn_params(w1, b1, w2, b2)  # cast/pad once, out of hot path

    out_fast = jax.block_until_ready(positionwise_feedforward(x, params))
    out_chunked = jax.block_until_ready(
        positionwise_feedforward(x, params, force_chunked=True, max_tf=256))

    # Pure-JAX reference with identical bf16 matmul inputs / f32 accumulation.
    h = jnp.dot(x.astype(jnp.bfloat16), w1.astype(jnp.bfloat16),
                preferred_element_type=jnp.float32) + b1
    h = jnp.maximum(h, 0.0)
    ref = jnp.dot(h.astype(jnp.bfloat16), w2.astype(jnp.bfloat16),
                  preferred_element_type=jnp.float32) + b2

    assert out_fast.shape == (B, S, d_model)
    assert out_chunked.shape == (B, S, d_model)
    assert jnp.allclose(out_fast, ref, atol=2e-2, rtol=2e-2), \
        "resident path mismatch vs reference"
    assert jnp.allclose(out_chunked, ref, atol=2e-2, rtol=2e-2), \
        "chunked path mismatch vs reference"

    print("KERNEL_OK")
</pallas_src>

<mosaic_0001>
module attributes {stable_mosaic.version = 11 : i64} {
  func.func @ffn_resident_kernel(%arg0: i32, %arg1: memref<128x256xbf16, #tpu.memory_space<vmem>>, %arg2: memref<256x512xbf16, #tpu.memory_space<vmem>>, %arg3: memref<1x512xf32, #tpu.memory_space<vmem>>, %arg4: memref<512x256xbf16, #tpu.memory_space<vmem>>, %arg5: memref<1x256xf32, #tpu.memory_space<vmem>>, %arg6: memref<128x256xf32, #tpu.memory_space<vmem>>) attributes {dimension_semantics = [#tpu.dimension_semantics<parallel>], iteration_bounds = array<i64: 2>, scalar_prefetch = 0 : i64, scratch_operands = 0 : i64, tpu.core_type = #tpu.core_type<tc>, window_params = [{transform_indices = @transform_0, window_bounds = array<i64: 128, 256>}, {pipeline_mode = #tpu.pipeline_mode<synchronous>, transform_indices = @transform_1, window_bounds = array<i64: 256, 512>}, {pipeline_mode = #tpu.pipeline_mode<synchronous>, transform_indices = @transform_2, window_bounds = array<i64: 1, 512>}, {pipeline_mode = #tpu.pipeline_mode<synchronous>, transform_indices = @transform_3, window_bounds = array<i64: 512, 256>}, {pipeline_mode = #tpu.pipeline_mode<synchronous>, transform_indices = @transform_4, window_bounds = array<i64: 1, 256>}, {transform_indices = @transform_5, window_bounds = array<i64: 128, 256>}]} {
    %c0 = arith.constant 0 : index
    %c0_0 = arith.constant 0 : index
    %0 = vector.load %arg1[%c0, %c0_0] : memref<128x256xbf16, #tpu.memory_space<vmem>>, vector<128x256xbf16>
    %c0_1 = arith.constant 0 : index
    %c0_2 = arith.constant 0 : index
    %1 = vector.load %arg2[%c0_1, %c0_2] : memref<256x512xbf16, #tpu.memory_space<vmem>>, vector<256x512xbf16>
    %cst = arith.constant dense<0.000000e+00> : vector<128x512xf32>
    %2 = tpu.matmul %0, %1, %cst {dimension_numbers = #tpu.dot_dimension_numbers<[1], [0], [0], [1], [0, 0, 1, 1], [], []>} : vector<128x256xbf16>, vector<256x512xbf16>, vector<128x512xf32> -> vector<128x512xf32>
    %c0_3 = arith.constant 0 : index
    %c0_4 = arith.constant 0 : index
    %3 = vector.load %arg3[%c0_3, %c0_4] : memref<1x512xf32, #tpu.memory_space<vmem>>, vector<1x512xf32>
    %4 = vector.broadcast %3 : vector<1x512xf32> to vector<128x512xf32>
    %5 = arith.addf %2, %4 : vector<128x512xf32>
    %cst_5 = arith.constant 0.000000e+00 : f32
    %6 = vector.broadcast %cst_5 : f32 to vector<128x512xf32>
    %7 = arith.maximumf %5, %6 : vector<128x512xf32>
    %8 = arith.truncf %7 : vector<128x512xf32> to vector<128x512xbf16>
    %c0_6 = arith.constant 0 : index
    %c0_7 = arith.constant 0 : index
    %9 = vector.load %arg4[%c0_6, %c0_7] : memref<512x256xbf16, #tpu.memory_space<vmem>>, vector<512x256xbf16>
    %cst_8 = arith.constant dense<0.000000e+00> : vector<128x256xf32>
    %10 = tpu.matmul %8, %9, %cst_8 {dimension_numbers = #tpu.dot_dimension_numbers<[1], [0], [0], [1], [0, 0, 1, 1], [], []>} : vector<128x512xbf16>, vector<512x256xbf16>, vector<128x256xf32> -> vector<128x256xf32>
    %c0_9 = arith.constant 0 : index
    %c0_10 = arith.constant 0 : index
    %11 = vector.load %arg5[%c0_9, %c0_10] : memref<1x256xf32, #tpu.memory_space<vmem>>, vector<1x256xf32>
    %12 = vector.broadcast %11 : vector<1x256xf32> to vector<128x256xf32>
    %13 = arith.addf %10, %12 : vector<128x256xf32>
    %c0_11 = arith.constant 0 : index
    %c0_12 = arith.constant 0 : index
    %14 = vector.load %arg6[%c0_11, %c0_12] : memref<128x256xf32, #tpu.memory_space<vmem>>, vector<128x256xf32>
    tpu.vector_store %arg6[%c0_11, %c0_12], %13 {strides = array<i32>} : memref<128x256xf32, #tpu.memory_space<vmem>>, vector<128x256xf32>,
    return
  }
  func.func @transform_0(%arg0: i32) -> (i32, i32) {
    %c0_i32 = arith.constant 0 : i32
    %c0_i32_0 = arith.constant 0 : i32
    return %arg0, %c0_i32 : i32, i32
  }
  func.func @transform_1(%arg0: i32) -> (i32, i32) {
    %c0_i32 = arith.constant 0 : i32
    %c0_i32_0 = arith.constant 0 : i32
    %c0_i32_1 = arith.constant 0 : i32
    return %c0_i32, %c0_i32_0 : i32, i32
  }
  func.func @transform_2(%arg0: i32) -> (i32, i32) {
    %c0_i32 = arith.constant 0 : i32
    %c0_i32_0 = arith.constant 0 : i32
    %c0_i32_1 = arith.constant 0 : i32
    return %c0_i32, %c0_i32_0 : i32, i32
  }
  func.func @transform_3(%arg0: i32) -> (i32, i32) {
    %c0_i32 = arith.constant 0 : i32
    %c0_i32_0 = arith.constant 0 : i32
    %c0_i32_1 = arith.constant 0 : i32
    return %c0_i32, %c0_i32_0 : i32, i32
  }
  func.func @transform_4(%arg0: i32) -> (i32, i32) {
    %c0_i32 = arith.constant 0 : i32
    %c0_i32_0 = arith.constant 0 : i32
    %c0_i32_1 = arith.constant 0 : i32
    return %c0_i32, %c0_i32_0 : i32, i32
  }
  func.func @transform_5(%arg0: i32) -> (i32, i32) {
    %c0_i32 = arith.constant 0 : i32
    %c0_i32_0 = arith.constant 0 : i32
    return %arg0, %c0_i32 : i32, i32
  }
}

</mosaic_0001>

<llo_original>
// kernel: tpu_custom_call.1
$region0: #{tpu_custom_call.1}
  #allocation0 [shape = 'u32[]', space=smem, size = 0x4, offset = 0x4, fixed_abs, tag = 'smem constant byte address 0x4 - core index']
  #allocation1 [shape = 'u32[144,128]{1,0:T(1,128)}', space=vmem, size = 0x12000, scoped, tag = 'internal scratch']
  %s0 = inlined_call_operand.hbm [shape: bf16[256,256], index: 0, kind: input, shape index: {}]
  %s1 = inlined_call_operand.hbm [shape: bf16[256,512], index: 1, kind: input, shape index: {}]
  %s2 = inlined_call_operand.vmem [shape: f32[1,512], index: 2, kind: input, shape index: {}]
  %s3 = inlined_call_operand.hbm [shape: bf16[512,256], index: 3, kind: input, shape index: {}]
  %s4 = inlined_call_operand.vmem [shape: f32[1,256], index: 4, kind: input, shape index: {}]
  %s5 = inlined_call_operand.hbm [shape: f32[256,256], index: 5, kind: output, shape index: {}]
  %s6 = sld [smem:[#allocation0]]
  $region65: #{tpu_custom_call.1} parent=0
    _
  %s8 = ssub.s32 1, %s6
  %s9 = scalar_select 0, %s8, %s6
  $region1: #{tpu_custom_call.1} parent=0
    #allocation2 [shape = 'u8[131072]{0}', space=vmem, size = 0x20000, scoped, tag = 'input window, operand 0']
    #allocation3 [shape = 's32[2]{0}', space=sflag, size = 0x8, scoped, tag = 'scoped memory for tpu_custom_call.1']
    #allocation4 [shape = 's32[2]{0}', space=sflag, size = 0x8, scoped, tag = 'scoped memory for tpu_custom_call.1']
    #allocation5 [shape = 'u8[262144]{0}', space=vmem, size = 0x40000, scoped, tag = 'input window, operand 1, single buffered']
    #allocation6 [shape = 's32[1]{0}', space=sflag, size = 0x4, scoped, tag = 'scoped memory for tpu_custom_call.1']
    #allocation7 [shape = 'u8[262144]{0}', space=vmem, size = 0x40000, scoped, tag = 'input window, operand 3, single buffered']
    #allocation8 [shape = 'u8[262144]{0}', space=vmem, size = 0x40000, scoped, tag = 'output window, operand 0']
    %10 = vsyncpa [#allocation3], 0
    %s11 = scalar_lea.sflag [#allocation3], 1
    %12 = vsyncpa %s11, 0
    %13 = vsyncpa [#allocation6], 0
    %14 = vsyncpa [#allocation4], 0
    %s15 = scalar_lea.sflag [#allocation4], 1
    %16 = vsyncpa %s15, 0
    loop: start=0, step=1, limit=4
    $region2: #{tpu_custom_call.1} parent=1 // loop_pre_header
      _
    $region3: #{tpu_custom_call.1} parent=1 // loop_header
      %s18 = sphi 0, %s22
      %p19 = scmp.ge.s32.totalorder %s18, 4
      %s28 = sphi 0, %s30
      %s31 = sphi 0, %s28
      %s32 = sphi 0, %s31
      %s48 = sphi 0, %s32
      %s52 = sphi 0, %s52
      %s54 = sphi 0, %s52
      %s55 = sphi 0, %s54
      %s69 = sphi 0, %s55
      %s73 = sphi 0, %s73
      %s75 = sphi 0, %s73
      %s76 = sphi 0, %s75
      %s90 = sphi 0, %s76
      %s94 = sphi 0, %s94
      %s96 = sphi 0, %s94
      %s97 = sphi 0, %s96
      %s111 = sphi 0, %s97
      %s115 = sphi 0, %s115
      %s117 = sphi 0, %s115
      %s118 = sphi 0, %s117
      %s132 = sphi 0, %s118
      %s138 = sphi 0, %s140
      %s141 = sphi 0, %s138
      %s142 = sphi 0, %s141
      %s158 = sphi 0, %s142
    $region4: #{tpu_custom_call.1} parent=1 // loop_header_branch
      %21 = sbr.rel (%p19) target = $region8
    $region5: #{tpu_custom_call.1} parent=1 // loop_body
      %s23 = ssub.s32 %s18, 1
      %s24 = ssub.s32 %s18, 2
      %s25 = sadd.s32 %s18, 1
      %s26 = ssub.s32 %s18, %s25
      %p27 = scmp.eq.s32.totalorder %s26, 0
      %s29 = sadd.s32 %s28, 1
      %s30 = scalar_select %p27, %s28, %s29
      %p33 = pneg %p27
      %p34 = scmp.eq.s32.totalorder %s18, 1
      %p35 = por %p33, %p34
      %p36 = scmp.ne.s32.totalorder %s28, %s31
      %p37 = scmp.eq.s32.totalorder %s18, 0
      %p38 = por %p36, %p37
      %p39 = scmp.ne.s32.totalorder %s28, %s31
      %p40 = scmp.eq.s32.totalorder %s23, 1
      %p41 = por %p39, %p40
      %p42 = scmp.ne.s32.totalorder %s31, %s32
      %p43 = scmp.eq.s32.totalorder %s23, 0
      %p44 = por %p42, %p43
      %p45 = scmp.ne.s32.totalorder %s31, %s32
      %p46 = scmp.eq.s32.totalorder %s24, 1
      %p47 = por %p45, %p46
      %p49 = scmp.ne.s32.totalorder %s32, %s48
      %p50 = scmp.eq.s32.totalorder %s24, 0
      %p51 = por %p49, %p50
      %s53 = sadd.s32 %s52, 1
      %p56 = scmp.eq.s32.totalorder %s18, 1
      %p57 = scmp.ne.s32.totalorder %s52, %s54
      %p58 = scmp.eq.s32.totalorder %s18, 0
      %p59 = por %p57, %p58
      %p60 = scmp.ne.s32.totalorder %s52, %s54
      %p61 = scmp.eq.s32.totalorder %s23, 1
      %p62 = por %p60, %p61
      %p63 = scmp.ne.s32.totalorder %s54, %s55
      %p64 = scmp.eq.s32.totalorder %s23, 0
      %p65 = por %p63, %p64
      %p66 = scmp.ne.s32.totalorder %s54, %s55
      %p67 = scmp.eq.s32.totalorder %s24, 1
      %p68 = por %p66, %p67
      %p70 = scmp.ne.s32.totalorder %s55, %s69
      %p71 = scmp.eq.s32.totalorder %s24, 0
      %p72 = por %p70, %p71
      %s74 = sadd.s32 %s73, 1
      %p77 = scmp.eq.s32.totalorder %s18, 1
      %p78 = scmp.ne.s32.totalorder %s73, %s75
      %p79 = scmp.eq.s32.totalorder %s18, 0
      %p80 = por %p78, %p79
      %p81 = scmp.ne.s32.totalorder %s73, %s75
      %p82 = scmp.eq.s32.totalorder %s23, 1
      %p83 = por %p81, %p82
      %p84 = scmp.ne.s32.totalorder %s75, %s76
      %p85 = scmp.eq.s32.totalorder %s23, 0
      %p86 = por %p84, %p85
      %p87 = scmp.ne.s32.totalorder %s75, %s76
      %p88 = scmp.eq.s32.totalorder %s24, 1
      %p89 = por %p87, %p88
      %p91 = scmp.ne.s32.totalorder %s76, %s90
      %p92 = scmp.eq.s32.totalorder %s24, 0
      %p93 = por %p91, %p92
      %s95 = sadd.s32 %s94, 1
      %p98 = scmp.eq.s32.totalorder %s18, 1
      %p99 = scmp.ne.s32.totalorder %s94, %s96
      %p100 = scmp.eq.s32.totalorder %s18, 0
      %p101 = por %p99, %p100
      %p102 = scmp.ne.s32.totalorder %s94, %s96
      %p103 = scmp.eq.s32.totalorder %s23, 1
      %p104 = por %p102, %p103
      %p105 = scmp.ne.s32.totalorder %s96, %s97
      %p106 = scmp.eq.s32.totalorder %s23, 0
      %p107 = por %p105, %p106
      %p108 = scmp.ne.s32.totalorder %s96, %s97
      %p109 = scmp.eq.s32.totalorder %s24, 1
      %p110 = por %p108, %p109
      %p112 = scmp.ne.s32.totalorder %s97, %s111
      %p113 = scmp.eq.s32.totalorder %s24, 0
      %p114 = por %p112, %p113
      %s116 = sadd.s32 %s115, 1
      %p119 = scmp.eq.s32.totalorder %s18, 1
      %p120 = scmp.ne.s32.totalorder %s115, %s117
      %p121 = scmp.eq.s32.totalorder %s18, 0
      %p122 = por %p120, %p121
      %p123 = scmp.ne.s32.totalorder %s115, %s117
      %p124 = scmp.eq.s32.totalorder %s23, 1
      %p125 = por %p123, %p124
      %p126 = scmp.ne.s32.totalorder %s117, %s118
      %p127 = scmp.eq.s32.totalorder %s23, 0
      %p128 = por %p126, %p127
      %p129 = scmp.ne.s32.totalorder %s117, %s118
      %p130 = scmp.eq.s32.totalorder %s24, 1
      %p131 = por %p129, %p130
      %p133 = scmp.ne.s32.totalorder %s118, %s132
      %p134 = scmp.eq.s32.totalorder %s24, 0
      %p135 = por %p133, %p134
      %s136 = ssub.s32 %s18, %s25
      %p137 = scmp.eq.s32.totalorder %s136, 0
      %s139 = sadd.s32 %s138, 1
      %s140 = scalar_select %p137, %s138, %s139
      %p143 = pneg %p137
      %p144 = scmp.eq.s32.totalorder %s18, 1
      %p145 = por %p143, %p144
      %p146 = scmp.ne.s32.totalorder %s138, %s141
      %p147 = scmp.eq.s32.totalorder %s18, 0
      %p148 = por %p146, %p147
      %p149 = scmp.ne.s32.totalorder %s138, %s141
      %p150 = scmp.eq.s32.totalorder %s23, 1
      %p151 = por %p149, %p150
      %p152 = scmp.ne.s32.totalorder %s141, %s142
      %p153 = scmp.eq.s32.totalorder %s23, 0
      %p154 = por %p152, %p153
      %p155 = scmp.ne.s32.totalorder %s141, %s142
      %p156 = scmp.eq.s32.totalorder %s24, 1
      %p157 = por %p155, %p156
      %p159 = scmp.ne.s32.totalorder %s142, %s158
      %p160 = scmp.eq.s32.totalorder %s24, 0
      %p161 = por %p159, %p160
      %p162 = scmp.le.s32.totalorder 1, %s18
      %p163 = scmp.lt.s32.totalorder %s18, 3
      %p164 = pnand %p162, %p163
      %p165 = pneg %p164
      // Predicated region
      $region9: #{tpu_custom_call.1} parent=5 // pred_check
        _
      $region10: #{tpu_custom_call.1} parent=5 // pred_check_branch
        %167 = sbr.rel (%p164) target = $region12
      $region11: #{tpu_custom_call.1} parent=5 // pred_region
        %s168 = ssub.s32 %s18, 1
        // Predicated region
        $region13: #{tpu_custom_call.1} parent=11 // pred_check
          %p169 = pneg %p65
        $region14: #{tpu_custom_call.1} parent=11 // pred_check_branch
          %171 = sbr.rel (%p169) target = $region16
        $region15: #{tpu_custom_call.1} parent=11 // pred_region
          %s173 = ssub.s32 8192, 8192
          %174 = vsyncadd [#allocation6], %s173
          %s175 = sshll.u32 [#allocation5], 4
          %s176 = int_to_ptr.vmem [resolvable:$true] %s175
          %181 = dma.hbm_to_vmem [thread:$0]  %s1, 8192, %s176, [#allocation6], 256, 256, 16
        $region16: #{tpu_custom_call.1} parent=11 // pred_fallthru
          _
        // Predicated region
        $region17: #{tpu_custom_call.1} parent=11 // pred_check
          %p182 = pneg %p86
        $region18: #{tpu_custom_call.1} parent=11 // pred_check_branch
          %184 = sbr.rel (%p182) target = $region20
        $region19: #{tpu_custom_call.1} parent=11 // pred_region
          _
        $region20: #{tpu_custom_call.1} parent=11 // pred_fallthru
          _
        // Predicated region
        $region21: #{tpu_custom_call.1} parent=11 // pred_check
          %p185 = pneg %p107
        $region22: #{tpu_custom_call.1} parent=11 // pred_check_branch
          %187 = sbr.rel (%p185) target = $region24
        $region23: #{tpu_custom_call.1} parent=11 // pred_region
          %s189 = ssub.s32 8192, 8192
          %190 = vsyncadd [#allocation6], %s189
          %s191 = sshll.u32 [#allocation7], 4
          %s192 = int_to_ptr.vmem [resolvable:$true] %s191
          %197 = dma.hbm_to_vmem [thread:$0]  %s3, 8192, %s192, [#allocation6], 128, 128, 8
        $region24: #{tpu_custom_call.1} parent=11 // pred_fallthru
          _
        // Predicated region
        $region25: #{tpu_custom_call.1} parent=11 // pred_check
          %p198 = pneg %p128
        $region26: #{tpu_custom_call.1} parent=11 // pred_check_branch
          %200 = sbr.rel (%p198) target = $region28
        $region27: #{tpu_custom_call.1} parent=11 // pred_region
          _
        $region28: #{tpu_custom_call.1} parent=11 // pred_fallthru
          _
      $region12: #{tpu_custom_call.1} parent=5 // pred_fallthru
        _
      %p201 = scmp.lt.s32.totalorder %s18, 2
      // Predicated region
      $region29: #{tpu_custom_call.1} parent=5 // pred_check
        %p202 = pneg %p201
      $region30: #{tpu_custom_call.1} parent=5 // pred_check_branch
        %204 = sbr.rel (%p202) target = $region32
      $region31: #{tpu_custom_call.1} parent=5 // pred_region
        // Predicated region
        $region33: #{tpu_custom_call.1} parent=31 // pred_check
          %p205 = pneg %p38
        $region34: #{tpu_custom_call.1} parent=31 // pred_check_branch
          %207 = sbr.rel (%p205) target = $region36
        $region35: #{tpu_custom_call.1} parent=31 // pred_region
          %s208 = sand.u32 %s28, 1
          %s209 = scalar_lea.sflag [#allocation3], %s208
          %s210 = sand.u32 %s28, 1
          %s211 = smul.addr %s210, 128
          %s212 = scalar_lea.vmem [#allocation2], %s211
          %s213 = smul.u32 16, %s18
          %s215 = ssub.s32 2048, 2048
          %216 = vsyncadd %s209, %s215
          %s217 = smul.addr %s213, 2
          %s218 = smul.addr %s217, 64
          %s219 = scalar_lea.hbm %s0, %s218
          %s220 = sshll.u32 %s212, 4
          %s221 = int_to_ptr.vmem [resolvable:$true] %s220
          %226 = dma.hbm_to_vmem [thread:$0]  %s219, 2048, %s221, %s209, 128, 128, 8
        $region36: #{tpu_custom_call.1} parent=31 // pred_fallthru
          _
      $region32: #{tpu_custom_call.1} parent=5 // pred_fallthru
        _
      %p227 = scmp.le.s32.totalorder 1, %s18
      %p228 = scmp.lt.s32.totalorder %s18, 3
      %p229 = pnand %p227, %p228
      %p230 = pneg %p229
      // Predicated region
      $region37: #{tpu_custom_call.1} parent=5 // pred_check
        _
      $region38: #{tpu_custom_call.1} parent=5 // pred_check_branch
        %232 = sbr.rel (%p229) target = $region40
      $region39: #{tpu_custom_call.1} parent=5 // pred_region
        %s233 = ssub.s32 %s18, 1
        %s234 = sand.u32 %s31, 1
        %s235 = scalar_lea.sflag [#allocation3], %s234
        %s236 = sand.u32 %s31, 1
        %s237 = smul.addr %s236, 128
        %s238 = scalar_lea.vmem [#allocation2], %s237
        // Predicated region
        $region41: #{tpu_custom_call.1} parent=39 // pred_check
          %p239 = pneg %p44
        $region42: #{tpu_custom_call.1} parent=39 // pred_check_branch
          %241 = sbr.rel (%p239) target = $region44
        $region43: #{tpu_custom_call.1} parent=39 // pred_region
          %242 = dma.done %s235, 2048
        $region44: #{tpu_custom_call.1} parent=39 // pred_fallthru
          _
        // Predicated region
        $region45: #{tpu_custom_call.1} parent=39 // pred_check
          %p243 = pneg %p65
        $region46: #{tpu_custom_call.1} parent=39 // pred_check_branch
          %245 = sbr.rel (%p243) target = $region48
        $region47: #{tpu_custom_call.1} parent=39 // pred_region
          %246 = dma.done [#allocation6], 8192
        $region48: #{tpu_custom_call.1} parent=39 // pred_fallthru
          _
        // Predicated region
        $region49: #{tpu_custom_call.1} parent=39 // pred_check
          %p247 = pneg %p107
        $region50: #{tpu_custom_call.1} parent=39 // pred_check_branch
          %249 = sbr.rel (%p247) target = $region52
        $region51: #{tpu_custom_call.1} parent=39 // pred_region
          %250 = dma.done [#allocation6], 8192
        $region52: #{tpu_custom_call.1} parent=39 // pred_fallthru
          _
        %s251 = sand.u32 %s31, 1
        %s252 = scalar_lea.sflag [#allocation3], %s251
        %s253 = sand.u32 %s31, 1
        %s254 = smul.addr %s253, 128
        %s255 = scalar_lea.vmem [#allocation2], %s254
        %p256 = pneg %p44
        %p257 = pneg %p41
        %p258 = pneg %p65
        %p259 = pneg %p62
        %p260 = pneg %p86
        %p261 = pneg %p83
        %p262 = pneg %p107
        %p263 = pneg %p104
        %p264 = pneg %p128
        %p265 = pneg %p125
        %p266 = pneg %p154
        %p267 = pneg %p151
        %s268 = sand.u32 %s141, 1
        %s269 = scalar_lea.sflag [#allocation4], %s268
        %s270 = sand.u32 %s141, 1
        %s271 = smul.addr %s270, 256
        %s272 = scalar_lea.vmem [#allocation8], %s271
        %s273 = smul.u32 16, %s23
        %s274 = smul.u32 16, %s23
        %v275 = vld [vmem:[%s238] sm:$0xff]
        %v276 = vld [vmem:[%s238 + $0x8] sm:$0xff]
        %v277 = vld [vmem:[%s238 + $0x10] sm:$0xff]
        %v278 = vld [vmem:[%s238 + $0x18] sm:$0xff]
        %v279 = vld [vmem:[%s238 + $0x20] sm:$0xff]
        %v280 = vld [vmem:[%s238 + $0x28] sm:$0xff]
        %v281 = vld [vmem:[%s238 + $0x30] sm:$0xff]
        %v282 = vld [vmem:[%s238 + $0x38] sm:$0xff]
        %v283 = vld [vmem:[%s238 + $0x40] sm:$0xff]
        %v284 = vld [vmem:[%s238 + $0x48] sm:$0xff]
        %v285 = vld [vmem:[%s238 + $0x50] sm:$0xff]
        %v286 = vld [vmem:[%s238 + $0x58] sm:$0xff]
        %v287 = vld [vmem:[%s238 + $0x60] sm:$0xff]
        %v288 = vld [vmem:[%s238 + $0x68] sm:$0xff]
        %v289 = vld [vmem:[%s238 + $0x70] sm:$0xff]
        %v290 = vld [vmem:[%s238 + $0x78] sm:$0xff]
        %v291 = vld [vmem:[#allocation5] sm:$0xff]
        %v292 = vld [vmem:[#allocation5 + $0x8] sm:$0xff]
        %v293 = vld [vmem:[#allocation5 + $0x10] sm:$0xff]
        %v294 = vld [vmem:[#allocation5 + $0x18] sm:$0xff]
        %v295 = vld [vmem:[#allocation5 + $0x20] sm:$0xff]
        %v296 = vld [vmem:[#allocation5 + $0x28] sm:$0xff]
        %v297 = vld [vmem:[#allocation5 + $0x30] sm:$0xff]
        %v298 = vld [vmem:[#allocation5 + $0x38] sm:$0xff]
        %v299 = vld [vmem:[#allocation5 + $0x40] sm:$0xff]
        %v300 = vld [vmem:[#allocation5 + $0x48] sm:$0xff]
        %v301 = vld [vmem:[#allocation5 + $0x50] sm:$0xff]
        %v302 = vld [vmem:[#allocation5 + $0x58] sm:$0xff]
        %v303 = vld [vmem:[#allocation5 + $0x60] sm:$0xff]
        %v304 = vld [vmem:[#allocation5 + $0x68] sm:$0xff]
        %v305 = vld [vmem:[#allocation5 + $0x70] sm:$0xff]
        %v306 = vld [vmem:[#allocation5 + $0x78] sm:$0xff]
        %v307 = vld [vmem:[#allocation5 + $0x80] sm:$0xff]
        %v308 = vld [vmem:[#allocation5 + $0x88] sm:$0xff]
        %v309 = vld [vmem:[#allocation5 + $0x90] sm:$0xff]
        %v310 = vld [vmem:[#allocation5 + $0x98] sm:$0xff]
        %v311 = vld [vmem:[#allocation5 + $0xa0] sm:$0xff]
        %v312 = vld [vmem:[#allocation5 + $0xa8] sm:$0xff]
        %v313 = vld [vmem:[#allocation5 + $0xb0] sm:$0xff]
        %v314 = vld [vmem:[#allocation5 + $0xb8] sm:$0xff]
        %v315 = vld [vmem:[#allocation5 + $0xc0] sm:$0xff]
        %v316 = vld [vmem:[#allocation5 + $0xc8] sm:$0xff]
        %v317 = vld [vmem:[#allocation5 + $0xd0] sm:$0xff]
        %v318 = vld [vmem:[#allocation5 + $0xd8] sm:$0xff]
        %v319 = vld [vmem:[#allocation5 + $0xe0] sm:$0xff]
        %v320 = vld [vmem:[#allocation5 + $0xe8] sm:$0xff]
        %v321 = vld [vmem:[#allocation5 + $0xf0] sm:$0xff]
        %v322 = vld [vmem:[#allocation5 + $0xf8] sm:$0xff]
        %v323 = vld [vmem:[#allocation5 + $0x100] sm:$0xff]
        %v324 = vld [vmem:[#allocation5 + $0x108] sm:$0xff]
        %v325 = vld [vmem:[#allocation5 + $0x110] sm:$0xff]
        %v326 = vld [vmem:[#allocation5 + $0x118] sm:$0xff]
        %v327 = vld [vmem:[#allocation5 + $0x120] sm:$0xff]
        %v328 = vld [vmem:[#allocation5 + $0x128] sm:$0xff]
        %v329 = vld [vmem:[#allocation5 + $0x130] sm:$0xff]
        %v330 = vld [vmem:[#allocation5 + $0x138] sm:$0xff]
        %v331 = vld [vmem:[#allocation5 + $0x140] sm:$0xff]
        %v332 = vld [vmem:[#allocation5 + $0x148] sm:$0xff]
        %v333 = vld [vmem:[#allocation5 + $0x150] sm:$0xff]
        %v334 = vld [vmem:[#allocation5 + $0x158] sm:$0xff]
        %v335 = vld [vmem:[#allocation5 + $0x160] sm:$0xff]
        %v336 = vld [vmem:[#allocation5 + $0x168] sm:$0xff]
        %v337 = vld [vmem:[#allocation5 + $0x170] sm:$0xff]
        %v338 = vld [vmem:[#allocation5 + $0x178] sm:$0xff]
        %v339 = vld [vmem:[#allocation5 + $0x180] sm:$0xff]
        %v340 = vld [vmem:[#allocation5 + $0x188] sm:$0xff]
        %v341 = vld [vmem:[#allocation5 + $0x190] sm:$0xff]
        %v342 = vld [vmem:[#allocation5 + $0x198] sm:$0xff]
        %v343 = vld [vmem:[#allocation5 + $0x1a0] sm:$0xff]
        %v344 = vld [vmem:[#allocation5 + $0x1a8] sm:$0xff]
        %v345 = vld [vmem:[#allocation5 + $0x1b0] sm:$0xff]
        %v346 = vld [vmem:[#allocation5 + $0x1b8] sm:$0xff]
        %v347 = vld [vmem:[#allocation5 + $0x1c0] sm:$0xff]
        %v348 = vld [vmem:[#allocation5 + $0x1c8] sm:$0xff]
        %v349 = vld [vmem:[#allocation5 + $0x1d0] sm:$0xff]
        %v350 = vld [vmem:[#allocation5 + $0x1d8] sm:$0xff]
        %v351 = vld [vmem:[#allocation5 + $0x1e0] sm:$0xff]
        %v352 = vld [vmem:[#allocation5 + $0x1e8] sm:$0xff]
        %v353 = vld [vmem:[#allocation5 + $0x1f0] sm:$0xff]
        %v354 = vld [vmem:[#allocation5 + $0x1f8] sm:$0xff]
        %v355 = vld [vmem:[%s2] sm:$0xf]
        %v357 = vlaneseq
        %v358 = vshrl.u32 %v357, 7
        %v359 = vsub.s32 0, %v358
        %v360 = vrot.slane %v355, %v359
        %v361 = vlaneseq
        %v362 = vshrl.u32 %v361, 7
        %v363 = vsub.s32 1, %v362
        %v364 = vrot.slane %v355, %v363
        %v365 = vlaneseq
        %v366 = vshrl.u32 %v365, 7
        %v367 = vsub.s32 2, %v366
        %v368 = vrot.slane %v355, %v367
        %v369 = vlaneseq
        %v370 = vshrl.u32 %v369, 7
        %v371 = vsub.s32 3, %v370
        %v372 = vrot.slane %v355, %v371
        %v393 = vunpack.c.l.b16 %v275
        %v394 = vunpack.c.h.b16 %v275
        %v395 = vunpack.c.l.b16 %v276
        %v396 = vunpack.c.h.b16 %v276
        %v397 = vunpack.c.l.b16 %v277
        %v398 = vunpack.c.h.b16 %v277
        %v399 = vunpack.c.l.b16 %v278
        %v400 = vunpack.c.h.b16 %v278
        %v401 = vunpack.c.l.b16 %v279
        %v402 = vunpack.c.h.b16 %v279
        %v403 = vunpack.c.l.b16 %v280
        %v404 = vunpack.c.h.b16 %v280
        %v405 = vunpack.c.l.b16 %v281
        %v406 = vunpack.c.h.b16 %v281
        %v407 = vunpack.c.l.b16 %v282
        %v408 = vunpack.c.h.b16 %v282
        %v409 = vunpack.c.l.b16 %v283
        %v410 = vunpack.c.h.b16 %v283
        %v411 = vunpack.c.l.b16 %v284
        %v412 = vunpack.c.h.b16 %v284
        %v413 = vunpack.c.l.b16 %v285
        %v414 = vunpack.c.h.b16 %v285
        %v415 = vunpack.c.l.b16 %v286
        %v416 = vunpack.c.h.b16 %v286
        %v417 = vunpack.c.l.b16 %v287
        %v418 = vunpack.c.h.b16 %v287
        %v419 = vunpack.c.l.b16 %v288
        %v420 = vunpack.c.h.b16 %v288
        %v421 = vunpack.c.l.b16 %v289
        %v422 = vunpack.c.h.b16 %v289
        %v423 = vunpack.c.l.b16 %v290
        %v424 = vunpack.c.h.b16 %v290
        %v425 = vpack.c.b16 %v395, %v393
        %v426 = vpack.c.b16 %v396, %v394
        %v427 = vpack.c.b16 %v399, %v397
        %v428 = vpack.c.b16 %v400, %v398
        %v429 = vpack.c.b16 %v403, %v401
        %v430 = vpack.c.b16 %v404, %v402
        %v431 = vpack.c.b16 %v407, %v405
        %v432 = vpack.c.b16 %v408, %v406
        %v433 = vpack.c.b16 %v411, %v409
        %v434 = vpack.c.b16 %v412, %v410
        %v435 = vpack.c.b16 %v415, %v413
        %v436 = vpack.c.b16 %v416, %v414
        %v437 = vpack.c.b16 %v419, %v417
        %v438 = vpack.c.b16 %v420, %v418
        %v439 = vpack.c.b16 %v423, %v421
        %v440 = vpack.c.b16 %v424, %v422
        %v521 = vunpack.c.l.b16 %v291
        %v522 = vunpack.c.h.b16 %v291
        %v523 = vunpack.c.l.b16 %v292
        %v524 = vunpack.c.h.b16 %v292
        %v525 = vunpack.c.l.b16 %v293
        %v526 = vunpack.c.h.b16 %v293
        %v527 = vunpack.c.l.b16 %v294
        %v528 = vunpack.c.h.b16 %v294
        %v529 = vunpack.c.l.b16 %v295
        %v530 = vunpack.c.h.b16 %v295
        %v531 = vunpack.c.l.b16 %v296
        %v532 = vunpack.c.h.b16 %v296
        %v533 = vunpack.c.l.b16 %v297
        %v534 = vunpack.c.h.b16 %v297
        %v535 = vunpack.c.l.b16 %v298
        %v536 = vunpack.c.h.b16 %v298
        %v537 = vunpack.c.l.b16 %v299
        %v538 = vunpack.c.h.b16 %v299
        %v539 = vunpack.c.l.b16 %v300
        %v540 = vunpack.c.h.b16 %v300
        %v541 = vunpack.c.l.b16 %v301
        %v542 = vunpack.c.h.b16 %v301
        %v543 = vunpack.c.l.b16 %v302
        %v544 = vunpack.c.h.b16 %v302
        %v545 = vunpack.c.l.b16 %v303
        %v546 = vunpack.c.h.b16 %v303
        %v547 = vunpack.c.l.b16 %v304
        %v548 = vunpack.c.h.b16 %v304
        %v549 = vunpack.c.l.b16 %v305
        %v550 = vunpack.c.h.b16 %v305
        %v551 = vunpack.c.l.b16 %v306
        %v552 = vunpack.c.h.b16 %v306
        %v553 = vunpack.c.l.b16 %v307
        %v554 = vunpack.c.h.b16 %v307
        %v555 = vunpack.c.l.b16 %v308
        %v556 = vunpack.c.h.b16 %v308
        %v557 = vunpack.c.l.b16 %v309
        %v558 = vunpack.c.h.b16 %v309
        %v559 = vunpack.c.l.b16 %v310
        %v560 = vunpack.c.h.b16 %v310
        %v561 = vunpack.c.l.b16 %v311
        %v562 = vunpack.c.h.b16 %v311
        %v563 = vunpack.c.l.b16 %v312
        %v564 = vunpack.c.h.b16 %v312
        %v565 = vunpack.c.l.b16 %v313
        %v566 = vunpack.c.h.b16 %v313
        %v567 = vunpack.c.l.b16 %v314
        %v568 = vunpack.c.h.b16 %v314
        %v569 = vunpack.c.l.b16 %v315
        %v570 = vunpack.c.h.b16 %v315
        %v571 = vunpack.c.l.b16 %v316
        %v572 = vunpack.c.h.b16 %v316
        %v573 = vunpack.c.l.b16 %v317
        %v574 = vunpack.c.h.b16 %v317
        %v575 = vunpack.c.l.b16 %v318
        %v576 = vunpack.c.h.b16 %v318
        %v577 = vunpack.c.l.b16 %v319
        %v578 = vunpack.c.h.b16 %v319
        %v579 = vunpack.c.l.b16 %v320
        %v580 = vunpack.c.h.b16 %v320
        %v581 = vunpack.c.l.b16 %v321
        %v582 = vunpack.c.h.b16 %v321
        %v583 = vunpack.c.l.b16 %v322
        %v584 = vunpack.c.h.b16 %v322
        %v585 = vunpack.c.l.b16 %v323
        %v586 = vunpack.c.h.b16 %v323
        %v587 = vunpack.c.l.b16 %v324
        %v588 = vunpack.c.h.b16 %v324
        %v589 = vunpack.c.l.b16 %v325
        %v590 = vunpack.c.h.b16 %v325
        %v591 = vunpack.c.l.b16 %v326
        %v592 = vunpack.c.h.b16 %v326
        %v593 = vunpack.c.l.b16 %v327
        %v594 = vunpack.c.h.b16 %v327
        %v595 = vunpack.c.l.b16 %v328
        %v596 = vunpack.c.h.b16 %v328
        %v597 = vunpack.c.l.b16 %v329
        %v598 = vunpack.c.h.b16 %v329
        %v599 = vunpack.c.l.b16 %v330
        %v600 = vunpack.c.h.b16 %v330
        %v601 = vunpack.c.l.b16 %v331
        %v602 = vunpack.c.h.b16 %v331
        %v603 = vunpack.c.l.b16 %v332
        %v604 = vunpack.c.h.b16 %v332
        %v605 = vunpack.c.l.b16 %v333
        %v606 = vunpack.c.h.b16 %v333
        %v607 = vunpack.c.l.b16 %v334
        %v608 = vunpack.c.h.b16 %v334
        %v609 = vunpack.c.l.b16 %v335
        %v610 = vunpack.c.h.b16 %v335
        %v611 = vunpack.c.l.b16 %v336
        %v612 = vunpack.c.h.b16 %v336
        %v613 = vunpack.c.l.b16 %v337
        %v614 = vunpack.c.h.b16 %v337
        %v615 = vunpack.c.l.b16 %v338
        %v616 = vunpack.c.h.b16 %v338
        %v617 = vunpack.c.l.b16 %v339
        %v618 = vunpack.c.h.b16 %v339
        %v619 = vunpack.c.l.b16 %v340
        %v620 = vunpack.c.h.b16 %v340
        %v621 = vunpack.c.l.b16 %v341
        %v622 = vunpack.c.h.b16 %v341
        %v623 = vunpack.c.l.b16 %v342
        %v624 = vunpack.c.h.b16 %v342
        %v625 = vunpack.c.l.b16 %v343
        %v626 = vunpack.c.h.b16 %v343
        %v627 = vunpack.c.l.b16 %v344
        %v628 = vunpack.c.h.b16 %v344
        %v629 = vunpack.c.l.b16 %v345
        %v630 = vunpack.c.h.b16 %v345
        %v631 = vunpack.c.l.b16 %v346
        %v632 = vunpack.c.h.b16 %v346
        %v633 = vunpack.c.l.b16 %v347
        %v634 = vunpack.c.h.b16 %v347
        %v635 = vunpack.c.l.b16 %v348
        %v636 = vunpack.c.h.b16 %v348
        %v637 = vunpack.c.l.b16 %v349
        %v638 = vunpack.c.h.b16 %v349
        %v639 = vunpack.c.l.b16 %v350
        %v640 = vunpack.c.h.b16 %v350
        %v641 = vunpack.c.l.b16 %v351
        %v642 = vunpack.c.h.b16 %v351
        %v643 = vunpack.c.l.b16 %v352
        %v644 = vunpack.c.h.b16 %v352
        %v645 = vunpack.c.l.b16 %v353
        %v646 = vunpack.c.h.b16 %v353
        %v647 = vunpack.c.l.b16 %v354
        %v648 = vunpack.c.h.b16 %v354
        %v649 = vpack.c.b16 %v525, %v521
        %v650 = vpack.c.b16 %v526, %v522
        %v651 = vpack.c.b16 %v527, %v523
        %v652 = vpack.c.b16 %v528, %v524
        %v653 = vpack.c.b16 %v533, %v529
        %v654 = vpack.c.b16 %v534, %v530
        %v655 = vpack.c.b16 %v535, %v531
        %v656 = vpack.c.b16 %v536, %v532
        %v657 = vpack.c.b16 %v541, %v537
        %v658 = vpack.c.b16 %v542, %v538
        %v659 = vpack.c.b16 %v543, %v539
        %v660 = vpack.c.b16 %v544, %v540
        %v661 = vpack.c.b16 %v549, %v545
        %v662 = vpack.c.b16 %v550, %v546
        %v663 = vpack.c.b16 %v551, %v547
        %v664 = vpack.c.b16 %v552, %v548
        %v665 = vpack.c.b16 %v557, %v553
        %v666 = vpack.c.b16 %v558, %v554
        %v667 = vpack.c.b16 %v559, %v555
        %v668 = vpack.c.b16 %v560, %v556
        %v669 = vpack.c.b16 %v565, %v561
        %v670 = vpack.c.b16 %v566, %v562
        %v671 = vpack.c.b16 %v567, %v563
        %v672 = vpack.c.b16 %v568, %v564
        %v673 = vpack.c.b16 %v573, %v569
        %v674 = vpack.c.b16 %v574, %v570
        %v675 = vpack.c.b16 %v575, %v571
        %v676 = vpack.c.b16 %v576, %v572
        %v677 = vpack.c.b16 %v581, %v577
        %v678 = vpack.c.b16 %v582, %v578
        %v679 = vpack.c.b16 %v583, %v579
        %v680 = vpack.c.b16 %v584, %v580
        %v681 = vpack.c.b16 %v589, %v585
        %v682 = vpack.c.b16 %v590, %v586
        %v683 = vpack.c.b16 %v591, %v587
        %v684 = vpack.c.b16 %v592, %v588
        %v685 = vpack.c.b16 %v597, %v593
        %v686 = vpack.c.b16 %v598, %v594
        %v687 = vpack.c.b16 %v599, %v595
        %v688 = vpack.c.b16 %v600, %v596
        %v689 = vpack.c.b16 %v605, %v601
        %v690 = vpack.c.b16 %v606, %v602
        %v691 = vpack.c.b16 %v607, %v603
        %v692 = vpack.c.b16 %v608, %v604
        %v693 = vpack.c.b16 %v613, %v609
        %v694 = vpack.c.b16 %v614, %v610
        %v695 = vpack.c.b16 %v615, %v611
        %v696 = vpack.c.b16 %v616, %v612
        %v697 = vpack.c.b16 %v621, %v617
        %v698 = vpack.c.b16 %v622, %v618
        %v699 = vpack.c.b16 %v623, %v619
        %v700 = vpack.c.b16 %v624, %v620
        %v701 = vpack.c.b16 %v629, %v625
        %v702 = vpack.c.b16 %v630, %v626
        %v703 = vpack.c.b16 %v631, %v627
        %v704 = vpack.c.b16 %v632, %v628
        %v705 = vpack.c.b16 %v637, %v633
        %v706 = vpack.c.b16 %v638, %v634
        %v707 = vpack.c.b16 %v639, %v635
        %v708 = vpack.c.b16 %v640, %v636
        %v709 = vpack.c.b16 %v645, %v641
        %v710 = vpack.c.b16 %v646, %v642
        %v711 = vpack.c.b16 %v647, %v643
        %v712 = vpack.c.b16 %v648, %v644
        %777 = vmatprep.subr.bf16.mxu0 %v650
        %778 = vmatpush1.bf16.msra.mxu0 %v649
        %779 = vmatprep.subr.bf16.mxu0 %v654
        %780 = vmatpush1.bf16.msra.mxu0 %v653
        %781 = vmatprep.subr.bf16.mxu0 %v658
        %782 = vmatpush1.bf16.msra.mxu0 %v657
        %783 = vmatprep.subr.bf16.mxu0 %v662
        %784 = vmatpush1.bf16.msra.mxu0 %v661
        %785 = vmatprep.subr.bf16.mxu0 %v666
        %786 = vmatpush1.bf16.msra.mxu0 %v665
        %787 = vmatprep.subr.bf16.mxu0 %v670
        %788 = vmatpush1.bf16.msra.mxu0 %v669
        %789 = vmatprep.subr.bf16.mxu0 %v674
        %790 = vmatpush1.bf16.msra.mxu0 %v673
        %791 = vmatprep.subr.bf16.mxu0 %v678
        %792 = vmatpush1.bf16.msra.mxu0 %v677
        %793 = vmatprep.subr.bf16.mxu0 %v682
        %794 = vmatpush1.bf16.msra.mxu0 %v681
        %795 = vmatprep.subr.bf16.mxu0 %v686
        %796 = vmatpush1.bf16.msra.mxu0 %v685
        %797 = vmatprep.subr.bf16.mxu0 %v690
        %798 = vmatpush1.bf16.msra.mxu0 %v689
        %799 = vmatprep.subr.bf16.mxu0 %v694
        %800 = vmatpush1.bf16.msra.mxu0 %v693
        %801 = vmatprep.subr.bf16.mxu0 %v698
        %802 = vmatpush1.bf16.msra.mxu0 %v697
        %803 = vmatprep.subr.bf16.mxu0 %v702
        %804 = vmatpush1.bf16.msra.mxu0 %v701
        %805 = vmatprep.subr.bf16.mxu0 %v706
        %806 = vmatpush1.bf16.msra.mxu0 %v705
        %807 = vmatprep.subr.bf16.mxu0 %v710
        %808 = vmatpush1.bf16.msra.mxu0 %v709
        %809 = vmatprep.mubr.bf16.mxu0 %v426
        %810 = vmatmul.mubr.bf16.gmra.mrb[0].mxu0 %v425
        %v811 = vpop.f32.mrb[0].mxu0
        %v812 = vadd.f32 %v360, %v811
        %v813 = vpop.f32.mrb[0].mxu0
        %v814 = vadd.f32 %v364, %v813
        %v815 = vpop.f32.mrb[0].mxu0
        %v816 = vadd.f32 %v360, %v815
        %v817 = vpop.f32.mrb[0].mxu0
        %v818 = vadd.f32 %v364, %v817
        %819 = vmatprep.mubr.bf16.mxu0 %v428
        %820 = vmatmul.mubr.bf16.gmra.mrb[0].mxu0 %v427
        %v821 = vpop.f32.mrb[0].mxu0
        %v822 = vadd.f32 %v360, %v821
        %v823 = vpop.f32.mrb[0].mxu0
        %v824 = vadd.f32 %v364, %v823
        %v825 = vpop.f32.mrb[0].mxu0
        %v826 = vadd.f32 %v360, %v825
        %v827 = vpop.f32.mrb[0].mxu0
        %v828 = vadd.f32 %v364, %v827
        %829 = vmatprep.mubr.bf16.mxu0 %v430
        %830 = vmatmul.mubr.bf16.gmra.mrb[0].mxu0 %v429
        %v831 = vpop.f32.mrb[0].mxu0
        %v832 = vadd.f32 %v360, %v831
        %v833 = vpop.f32.mrb[0].mxu0
        %v834 = vadd.f32 %v364, %v833
        %v835 = vpop.f32.mrb[0].mxu0
        %v836 = vadd.f32 %v360, %v835
        %v837 = vpop.f32.mrb[0].mxu0
        %v838 = vadd.f32 %v364, %v837
        %839 = vmatprep.mubr.bf16.mxu0 %v432
        %840 = vmatmul.mubr.bf16.gmra.mrb[0].mxu0 %v431
        %v841 = vpop.f32.mrb[0].mxu0
        %v842 = vadd.f32 %v360, %v841
        %v843 = vpop.f32.mrb[0].mxu0
        %v844 = vadd.f32 %v364, %v843
        %v845 = vpop.f32.mrb[0].mxu0
        %v846 = vadd.f32 %v360, %v845
        %v847 = vpop.f32.mrb[0].mxu0
        %v848 = vadd.f32 %v364, %v847
        %849 = vmatprep.mubr.bf16.mxu0 %v434
        %850 = vmatmul.mubr.bf16.gmra.mrb[0].mxu0 %v433
        %v851 = vpop.f32.mrb[0].mxu0
        %v852 = vadd.f32 %v360, %v851
        %v853 = vpop.f32.mrb[0].mxu0
        %v854 = vadd.f32 %v364, %v853
        %v855 = vpop.f32.mrb[0].mxu0
        %v856 = vadd.f32 %v360, %v855
        %v857 = vpop.f32.mrb[0].mxu0
        %v858 = vadd.f32 %v364, %v857
        %859 = vmatprep.mubr.bf16.mxu0 %v436
        %860 = vmatmul.mubr.bf16.gmra.mrb[0].mxu0 %v435
        %v861 = vpop.f32.mrb[0].mxu0
        %v862 = vadd.f32 %v360, %v861
        %v863 = vpop.f32.mrb[0].mxu0
        %v864 = vadd.f32 %v364, %v863
        %v865 = vpop.f32.mrb[0].mxu0
        %v866 = vadd.f32 %v360, %v865
        %v867 = vpop.f32.mrb[0].mxu0
        %v868 = vadd.f32 %v364, %v867
        %869 = vmatprep.mubr.bf16.mxu0 %v438
        %870 = vmatmul.mubr.bf16.gmra.mrb[0].mxu0 %v437
        %v871 = vpop.f32.mrb[0].mxu0
        %v872 = vadd.f32 %v360, %v871
        %v873 = vpop.f32.mrb[0].mxu0
        %v874 = vadd.f32 %v364, %v873
        %v875 = vpop.f32.mrb[0].mxu0
        %v876 = vadd.f32 %v360, %v875
        %v877 = vpop.f32.mrb[0].mxu0
        %v878 = vadd.f32 %v364, %v877
        %879 = vmatprep.mubr.bf16.mxu0 %v440
        %880 = vmatmul.mubr.bf16.gmra.mrb[0].mxu0 %v439
        %v881 = vpop.f32.mrb[0].mxu0
        %v882 = vadd.f32 %v360, %v881
        %v883 = vpop.f32.mrb[0].mxu0
        %v884 = vadd.f32 %v364, %v883
        %v885 = vpop.f32.mrb[0].mxu0
        %v886 = vadd.f32 %v360, %v885
        %v887 = vpop.f32.mrb[0].mxu0
        %v888 = vadd.f32 %v364, %v887
        %889 = vdwg.mxu0
        %890 = vmatprep.subr.bf16.mxu0 %v652
        %891 = vmatpush1.bf16.msra.mxu0 %v651
        %892 = vmatprep.subr.bf16.mxu0 %v656
        %893 = vmatpush1.bf16.msra.mxu0 %v655
        %894 = vmatprep.subr.bf16.mxu0 %v660
        %895 = vmatpush1.bf16.msra.mxu0 %v659
        %896 = vmatprep.subr.bf16.mxu0 %v664
        %897 = vmatpush1.bf16.msra.mxu0 %v663
        %898 = vmatprep.subr.bf16.mxu0 %v668
        %899 = vmatpush1.bf16.msra.mxu0 %v667
        %900 = vmatprep.subr.bf16.mxu0 %v672
        %901 = vmatpush1.bf16.msra.mxu0 %v671
        %902 = vmatprep.subr.bf16.mxu0 %v676
        %903 = vmatpush1.bf16.msra.mxu0 %v675
        %904 = vmatprep.subr.bf16.mxu0 %v680
        %905 = vmatpush1.bf16.msra.mxu0 %v679
        %906 = vmatprep.subr.bf16.mxu0 %v684
        %907 = vmatpush1.bf16.msra.mxu0 %v683
        %908 = vmatprep.subr.bf16.mxu0 %v688
        %909 = vmatpush1.bf16.msra.mxu0 %v687
        %910 = vmatprep.subr.bf16.mxu0 %v692
        %911 = vmatpush1.bf16.msra.mxu0 %v691
        %912 = vmatprep.subr.bf16.mxu0 %v696
        %913 = vmatpush1.bf16.msra.mxu0 %v695
        %914 = vmatprep.subr.bf16.mxu0 %v700
        %915 = vmatpush1.bf16.msra.mxu0 %v699
        %916 = vmatprep.subr.bf16.mxu0 %v704
        %917 = vmatpush1.bf16.msra.mxu0 %v703
        %918 = vmatprep.subr.bf16.mxu0 %v708
        %919 = vmatpush1.bf16.msra.mxu0 %v707
        %920 = vmatprep.subr.bf16.mxu0 %v712
        %921 = vmatpush1.bf16.msra.mxu0 %v711
        %922 = vmatprep.mubr.bf16.mxu0 %v426
        %923 = vmatmul.mubr.bf16.gmra.mrb[0].mxu0 %v425
        %v924 = vpop.f32.mrb[0].mxu0
        %v925 = vadd.f32 %v368, %v924
        %v926 = vpop.f32.mrb[0].mxu0
        %v927 = vadd.f32 %v372, %v926
        %v928 = vpop.f32.mrb[0].mxu0
        %v929 = vadd.f32 %v368, %v928
        %v930 = vpop.f32.mrb[0].mxu0
        %v931 = vadd.f32 %v372, %v930
        %932 = vmatprep.mubr.bf16.mxu0 %v428
        %933 = vmatmul.mubr.bf16.gmra.mrb[0].mxu0 %v427
        %v934 = vpop.f32.mrb[0].mxu0
        %v935 = vadd.f32 %v368, %v934
        %v936 = vpop.f32.mrb[0].mxu0
        %v937 = vadd.f32 %v372, %v936
        %v938 = vpop.f32.mrb[0].mxu0
        %v939 = vadd.f32 %v368, %v938
        %v940 = vpop.f32.mrb[0].mxu0
        %v941 = vadd.f32 %v372, %v940
        %942 = vmatprep.mubr.bf16.mxu0 %v430
        %943 = vmatmul.mubr.bf16.gmra.mrb[0].mxu0 %v429
        %v944 = vpop.f32.mrb[0].mxu0
        %v945 = vadd.f32 %v368, %v944
        %v946 = vpop.f32.mrb[0].mxu0
        %v947 = vadd.f32 %v372, %v946
        %v948 = vpop.f32.mrb[0].mxu0
        %v949 = vadd.f32 %v368, %v948
        %v950 = vpop.f32.mrb[0].mxu0
        %v951 = vadd.f32 %v372, %v950
        %952 = vmatprep.mubr.bf16.mxu0 %v432
        %953 = vmatmul.mubr.bf16.gmra.mrb[0].mxu0 %v431
        %v954 = vpop.f32.mrb[0].mxu0
        %v955 = vadd.f32 %v368, %v954
        %v956 = vpop.f32.mrb[0].mxu0
        %v957 = vadd.f32 %v372, %v956
        %v958 = vpop.f32.mrb[0].mxu0
        %v959 = vadd.f32 %v368, %v958
        %v960 = vpop.f32.mrb[0].mxu0
        %v961 = vadd.f32 %v372, %v960
        %962 = vmatprep.mubr.bf16.mxu0 %v434
        %963 = vmatmul.mubr.bf16.gmra.mrb[0].mxu0 %v433
        %v964 = vpop.f32.mrb[0].mxu0
        %v965 = vadd.f32 %v368, %v964
        %v966 = vpop.f32.mrb[0].mxu0
        %v967 = vadd.f32 %v372, %v966
        %v968 = vpop.f32.mrb[0].mxu0
        %v969 = vadd.f32 %v368, %v968
        %v970 = vpop.f32.mrb[0].mxu0
        %v971 = vadd.f32 %v372, %v970
        %972 = vmatprep.mubr.bf16.mxu0 %v436
        %973 = vmatmul.mubr.bf16.gmra.mrb[0].mxu0 %v435
        %v974 = vpop.f32.mrb[0].mxu0
        %v975 = vadd.f32 %v368, %v974
        %v976 = vpop.f32.mrb[0].mxu0
        %v977 = vadd.f32 %v372, %v976
        %v978 = vpop.f32.mrb[0].mxu0
        %v979 = vadd.f32 %v368, %v978
        %v980 = vpop.f32.mrb[0].mxu0
        %v981 = vadd.f32 %v372, %v980
        %982 = vmatprep.mubr.bf16.mxu0 %v438
        %983 = vmatmul.mubr.bf16.gmra.mrb[0].mxu0 %v437
        %v984 = vpop.f32.mrb[0].mxu0
        %v985 = vadd.f32 %v368, %v984
        %v986 = vpop.f32.mrb[0].mxu0
        %v987 = vadd.f32 %v372, %v986
        %v988 = vpop.f32.mrb[0].mxu0
        %v989 = vadd.f32 %v368, %v988
        %v990 = vpop.f32.mrb[0].mxu0
        %v991 = vadd.f32 %v372, %v990
        %992 = vmatprep.mubr.bf16.mxu0 %v440
        %993 = vmatmul.mubr.bf16.gmra.mrb[0].mxu0 %v439
        %v994 = vpop.f32.mrb[0].mxu0
        %v995 = vadd.f32 %v368, %v994
        %v996 = vpop.f32.mrb[0].mxu0
        %v997 = vadd.f32 %v372, %v996
        %v998 = vpop.f32.mrb[0].mxu0
        %v999 = vadd.f32 %v368, %v998
        %v1000 = vpop.f32.mrb[0].mxu0
        %v1001 = vadd.f32 %v372, %v1000
        %1002 = vdwg.mxu0
        %v1003 = vmax.f32 %v812, 0.0
        %v1004 = vmax.f32 %v814, 0.0
        %v1005 = vmax.f32 %v925, 0.0
        %v1006 = vmax.f32 %v927, 0.0
        %v1007 = vmax.f32 %v816, 0.0
        %v1008 = vmax.f32 %v818, 0.0
        %v1009 = vmax.f32 %v929, 0.0
        %v1010 = vmax.f32 %v931, 0.0
        %v1011 = vmax.f32 %v822, 0.0
        %v1012 = vmax.f32 %v824, 0.0
        %v1013 = vmax.f32 %v935, 0.0
        %v1014 = vmax.f32 %v937, 0.0
        %v1015 = vmax.f32 %v826, 0.0
        %v1016 = vmax.f32 %v828, 0.0
        %v1017 = vmax.f32 %v939, 0.0
        %v1018 = vmax.f32 %v941, 0.0
        %v1019 = vmax.f32 %v832, 0.0
        %v1020 = vmax.f32 %v834, 0.0
        %v1021 = vmax.f32 %v945, 0.0
        %v1022 = vmax.f32 %v947, 0.0
        %v1023 = vmax.f32 %v836, 0.0
        %v1024 = vmax.f32 %v838, 0.0
        %v1025 = vmax.f32 %v949, 0.0
        %v1026 = vmax.f32 %v951, 0.0
        %v1027 = vmax.f32 %v842, 0.0
        %v1028 = vmax.f32 %v844, 0.0
        %v1029 = vmax.f32 %v955, 0.0
        %v1030 = vmax.f32 %v957, 0.0
        %v1031 = vmax.f32 %v846, 0.0
        %v1032 = vmax.f32 %v848, 0.0
        %v1033 = vmax.f32 %v959, 0.0
        %v1034 = vmax.f32 %v961, 0.0
        %v1035 = vmax.f32 %v852, 0.0
        %v1036 = vmax.f32 %v854, 0.0
        %v1037 = vmax.f32 %v965, 0.0
        %v1038 = vmax.f32 %v967, 0.0
        %v1039 = vmax.f32 %v856, 0.0
        %v1040 = vmax.f32 %v858, 0.0
        %v1041 = vmax.f32 %v969, 0.0
        %v1042 = vmax.f32 %v971, 0.0
        %v1043 = vmax.f32 %v862, 0.0
        %v1044 = vmax.f32 %v864, 0.0
        %v1045 = vmax.f32 %v975, 0.0
        %v1046 = vmax.f32 %v977, 0.0
        %v1047 = vmax.f32 %v866, 0.0
        %v1048 = vmax.f32 %v868, 0.0
        %v1049 = vmax.f32 %v979, 0.0
        %v1050 = vmax.f32 %v981, 0.0
        %v1051 = vmax.f32 %v872, 0.0
        %v1052 = vmax.f32 %v874, 0.0
        %v1053 = vmax.f32 %v985, 0.0
        %v1054 = vmax.f32 %v987, 0.0
        %v1055 = vmax.f32 %v876, 0.0
        %v1056 = vmax.f32 %v878, 0.0
        %v1057 = vmax.f32 %v989, 0.0
        %v1058 = vmax.f32 %v991, 0.0
        %v1059 = vmax.f32 %v882, 0.0
        %v1060 = vmax.f32 %v884, 0.0
        %v1061 = vmax.f32 %v995, 0.0
        %v1062 = vmax.f32 %v997, 0.0
        %v1063 = vmax.f32 %v886, 0.0
        %v1064 = vmax.f32 %v888, 0.0
        %v1065 = vmax.f32 %v999, 0.0
        %v1066 = vmax.f32 %v1001, 0.0
        %v1067 = vpack.c.bf16 %v1007, %v1003
        %v1068 = vpack.c.bf16 %v1008, %v1004
        %v1069 = vpack.c.bf16 %v1009, %v1005
        %v1070 = vpack.c.bf16 %v1010, %v1006
        %v1071 = vpack.c.bf16 %v1015, %v1011
        %v1072 = vpack.c.bf16 %v1016, %v1012
        %v1073 = vpack.c.bf16 %v1017, %v1013
        %v1074 = vpack.c.bf16 %v1018, %v1014
        %v1075 = vpack.c.bf16 %v1023, %v1019
        %v1076 = vpack.c.bf16 %v1024, %v1020
        %v1077 = vpack.c.bf16 %v1025, %v1021
        %v1078 = vpack.c.bf16 %v1026, %v1022
        %v1079 = vpack.c.bf16 %v1031, %v1027
        %v1080 = vpack.c.bf16 %v1032, %v1028
        %v1081 = vpack.c.bf16 %v1033, %v1029
        %v1082 = vpack.c.bf16 %v1034, %v1030
        %v1083 = vpack.c.bf16 %v1039, %v1035
        %v1084 = vpack.c.bf16 %v1040, %v1036
        %v1085 = vpack.c.bf16 %v1041, %v1037
        %v1086 = vpack.c.bf16 %v1042, %v1038
        %v1087 = vpack.c.bf16 %v1047, %v1043
        %v1088 = vpack.c.bf16 %v1048, %v1044
        %v1089 = vpack.c.bf16 %v1049, %v1045
        %v1090 = vpack.c.bf16 %v1050, %v1046
        %v1091 = vpack.c.bf16 %v1055, %v1051
        %v1092 = vpack.c.bf16 %v1056, %v1052
        %v1093 = vpack.c.bf16 %v1057, %v1053
        %v1094 = vpack.c.bf16 %v1058, %v1054
        %v1095 = vpack.c.bf16 %v1063, %v1059
        %v1096 = vpack.c.bf16 %v1064, %v1060
        %v1097 = vpack.c.bf16 %v1065, %v1061
        %v1098 = vpack.c.bf16 %v1066, %v1062
        %v1099 = vld [vmem:[#allocation7] sm:$0xff]
        %v1100 = vld [vmem:[#allocation7 + $0x8] sm:$0xff]
        %v1101 = vld [vmem:[#allocation7 + $0x10] sm:$0xff]
        %v1102 = vld [vmem:[#allocation7 + $0x18] sm:$0xff]
        %v1103 = vld [vmem:[#allocation7 + $0x20] sm:$0xff]
        %v1104 = vld [vmem:[#allocation7 + $0x28] sm:$0xff]
        %v1105 = vld [vmem:[#allocation7 + $0x30] sm:$0xff]
        %v1106 = vld [vmem:[#allocation7 + $0x38] sm:$0xff]
        %v1107 = vld [vmem:[#allocation7 + $0x40] sm:$0xff]
        %v1108 = vld [vmem:[#allocation7 + $0x48] sm:$0xff]
        %v1109 = vld [vmem:[#allocation7 + $0x50] sm:$0xff]
        %v1110 = vld [vmem:[#allocation7 + $0x58] sm:$0xff]
        %v1111 = vld [vmem:[#allocation7 + $0x60] sm:$0xff]
        %v1112 = vld [vmem:[#allocation7 + $0x68] sm:$0xff]
        %v1113 = vld [vmem:[#allocation7 + $0x70] sm:$0xff]
        %v1114 = vld [vmem:[#allocation7 + $0x78] sm:$0xff]
        %v1115 = vld [vmem:[#allocation7 + $0x80] sm:$0xff]
        %v1116 = vld [vmem:[#allocation7 + $0x88] sm:$0xff]
        %v1117 = vld [vmem:[#allocation7 + $0x90] sm:$0xff]
        %v1118 = vld [vmem:[#allocation7 + $0x98] sm:$0xff]
        %v1119 = vld [vmem:[#allocation7 + $0xa0] sm:$0xff]
        %v1120 = vld [vmem:[#allocation7 + $0xa8] sm:$0xff]
        %v1121 = vld [vmem:[#allocation7 + $0xb0] sm:$0xff]
        %v1122 = vld [vmem:[#allocation7 + $0xb8] sm:$0xff]
        %v1123 = vld [vmem:[#allocation7 + $0xc0] sm:$0xff]
        %v1124 = vld [vmem:[#allocation7 + $0xc8] sm:$0xff]
        %v1125 = vld [vmem:[#allocation7 + $0xd0] sm:$0xff]
        %v1126 = vld [vmem:[#allocation7 + $0xd8] sm:$0xff]
        %v1127 = vld [vmem:[#allocation7 + $0xe0] sm:$0xff]
        %v1128 = vld [vmem:[#allocation7 + $0xe8] sm:$0xff]
        %v1129 = vld [vmem:[#allocation7 + $0xf0] sm:$0xff]
        %v1130 = vld [vmem:[#allocation7 + $0xf8] sm:$0xff]
        %v1131 = vld [vmem:[#allocation7 + $0x100] sm:$0xff]
        %v1132 = vld [vmem:[#allocation7 + $0x108] sm:$0xff]
        %v1133 = vld [vmem:[#allocation7 + $0x110] sm:$0xff]
        %v1134 = vld [vmem:[#allocation7 + $0x118] sm:$0xff]
        %v1135 = vld [vmem:[#allocation7 + $0x120] sm:$0xff]
        %v1136 = vld [vmem:[#allocation7 + $0x128] sm:$0xff]
        %v1137 = vld [vmem:[#allocation7 + $0x130] sm:$0xff]
        %v1138 = vld [vmem:[#allocation7 + $0x138] sm:$0xff]
        %v1139 = vld [vmem:[#allocation7 + $0x140] sm:$0xff]
        %v1140 = vld [vmem:[#allocation7 + $0x148] sm:$0xff]
        %v1141 = vld [vmem:[#allocation7 + $0x150] sm:$0xff]
        %v1142 = vld [vmem:[#allocation7 + $0x158] sm:$0xff]
        %v1143 = vld [vmem:[#allocation7 + $0x160] sm:$0xff]
        %v1144 = vld [vmem:[#allocation7 + $0x168] sm:$0xff]
        %v1145 = vld [vmem:[#allocation7 + $0x170] sm:$0xff]
        %v1146 = vld [vmem:[#allocation7 + $0x178] sm:$0xff]
        %v1147 = vld [vmem:[#allocation7 + $0x180] sm:$0xff]
        %v1148 = vld [vmem:[#allocation7 + $0x188] sm:$0xff]
        %v1149 = vld [vmem:[#allocation7 + $0x190] sm:$0xff]
        %v1150 = vld [vmem:[#allocation7 + $0x198] sm:$0xff]
        %v1151 = vld [vmem:[#allocation7 + $0x1a0] sm:$0xff]
        %v1152 = vld [vmem:[#allocation7 + $0x1a8] sm:$0xff]
        %v1153 = vld [vmem:[#allocation7 + $0x1b0] sm:$0xff]
        %v1154 = vld [vmem:[#allocation7 + $0x1b8] sm:$0xff]
        %v1155 = vld [vmem:[#allocation7 + $0x1c0] sm:$0xff]
        %v1156 = vld [vmem:[#allocation7 + $0x1c8] sm:$0xff]
        %v1157 = vld [vmem:[#allocation7 + $0x1d0] sm:$0xff]
        %v1158 = vld [vmem:[#allocation7 + $0x1d8] sm:$0xff]
        %v1159 = vld [vmem:[#allocation7 + $0x1e0] sm:$0xff]
        %v1160 = vld [vmem:[#allocation7 + $0x1e8] sm:$0xff]
        %v1161 = vld [vmem:[#allocation7 + $0x1f0] sm:$0xff]
        %v1162 = vld [vmem:[#allocation7 + $0x1f8] sm:$0xff]
        %v1163 = vld [vmem:[%s4] sm:$0x3]
        %v1165 = vlaneseq
        %v1166 = vshrl.u32 %v1165, 7
        %v1167 = vsub.s32 0, %v1166
        %v1168 = vrot.slane %v1163, %v1167
        %v1169 = vlaneseq
        %v1170 = vshrl.u32 %v1169, 7
        %v1171 = vsub.s32 1, %v1170
        %v1172 = vrot.slane %v1163, %v1171
        %v1239 = vunpack.c.l.b16 %v1099
        %v1240 = vunpack.c.h.b16 %v1099
        %v1241 = vunpack.c.l.b16 %v1100
        %v1242 = vunpack.c.h.b16 %v1100
        %v1243 = vunpack.c.l.b16 %v1101
        %v1244 = vunpack.c.h.b16 %v1101
        %v1245 = vunpack.c.l.b16 %v1102
        %v1246 = vunpack.c.h.b16 %v1102
        %v1247 = vunpack.c.l.b16 %v1103
        %v1248 = vunpack.c.h.b16 %v1103
        %v1249 = vunpack.c.l.b16 %v1104
        %v1250 = vunpack.c.h.b16 %v1104
        %v1251 = vunpack.c.l.b16 %v1105
        %v1252 = vunpack.c.h.b16 %v1105
        %v1253 = vunpack.c.l.b16 %v1106
        %v1254 = vunpack.c.h.b16 %v1106
        %v1255 = vunpack.c.l.b16 %v1107
        %v1256 = vunpack.c.h.b16 %v1107
        %v1257 = vunpack.c.l.b16 %v1108
        %v1258 = vunpack.c.h.b16 %v1108
        %v1259 = vunpack.c.l.b16 %v1109
        %v1260 = vunpack.c.h.b16 %v1109
        %v1261 = vunpack.c.l.b16 %v1110
        %v1262 = vunpack.c.h.b16 %v1110
        %v1263 = vunpack.c.l.b16 %v1111
        %v1264 = vunpack.c.h.b16 %v1111
        %v1265 = vunpack.c.l.b16 %v1112
        %v1266 = vunpack.c.h.b16 %v1112
        %v1267 = vunpack.c.l.b16 %v1113
        %v1268 = vunpack.c.h.b16 %v1113
        %v1269 = vunpack.c.l.b16 %v1114
        %v1270 = vunpack.c.h.b16 %v1114
        %v1271 = vunpack.c.l.b16 %v1115
        %v1272 = vunpack.c.h.b16 %v1115
        %v1273 = vunpack.c.l.b16 %v1116
        %v1274 = vunpack.c.h.b16 %v1116
        %v1275 = vunpack.c.l.b16 %v1117
        %v1276 = vunpack.c.h.b16 %v1117
        %v1277 = vunpack.c.l.b16 %v1118
        %v1278 = vunpack.c.h.b16 %v1118
        %v1279 = vunpack.c.l.b16 %v1119
        %v1280 = vunpack.c.h.b16 %v1119
        %v1281 = vunpack.c.l.b16 %v1120
        %v1282 = vunpack.c.h.b16 %v1120
        %v1283 = vunpack.c.l.b16 %v1121
        %v1284 = vunpack.c.h.b16 %v1121
        %v1285 = vunpack.c.l.b16 %v1122
        %v1286 = vunpack.c.h.b16 %v1122
        %v1287 = vunpack.c.l.b16 %v1123
        %v1288 = vunpack.c.h.b16 %v1123
        %v1289 = vunpack.c.l.b16 %v1124
        %v1290 = vunpack.c.h.b16 %v1124
        %v1291 = vunpack.c.l.b16 %v1125
        %v1292 = vunpack.c.h.b16 %v1125
        %v1293 = vunpack.c.l.b16 %v1126
        %v1294 = vunpack.c.h.b16 %v1126
        %v1295 = vunpack.c.l.b16 %v1127
        %v1296 = vunpack.c.h.b16 %v1127
        %v1297 = vunpack.c.l.b16 %v1128
        %v1298 = vunpack.c.h.b16 %v1128
        %v1299 = vunpack.c.l.b16 %v1129
        %v1300 = vunpack.c.h.b16 %v1129
        %v1301 = vunpack.c.l.b16 %v1130
        %v1302 = vunpack.c.h.b16 %v1130
        %v1303 = vunpack.c.l.b16 %v1131
        %v1304 = vunpack.c.h.b16 %v1131
        %v1305 = vunpack.c.l.b16 %v1132
        %v1306 = vunpack.c.h.b16 %v1132
        %v1307 = vunpack.c.l.b16 %v1133
        %v1308 = vunpack.c.h.b16 %v1133
        %v1309 = vunpack.c.l.b16 %v1134
        %v1310 = vunpack.c.h.b16 %v1134
        %v1311 = vunpack.c.l.b16 %v1135
        %v1312 = vunpack.c.h.b16 %v1135
        %v1313 = vunpack.c.l.b16 %v1136
        %v1314 = vunpack.c.h.b16 %v1136
        %v1315 = vunpack.c.l.b16 %v1137
        %v1316 = vunpack.c.h.b16 %v1137
        %v1317 = vunpack.c.l.b16 %v1138
        %v1318 = vunpack.c.h.b16 %v1138
        %v1319 = vunpack.c.l.b16 %v1139
        %v1320 = vunpack.c.h.b16 %v1139
        %v1321 = vunpack.c.l.b16 %v1140
        %v1322 = vunpack.c.h.b16 %v1140
        %v1323 = vunpack.c.l.b16 %v1141
        %v1324 = vunpack.c.h.b16 %v1141
        %v1325 = vunpack.c.l.b16 %v1142
        %v1326 = vunpack.c.h.b16 %v1142
        %v1327 = vunpack.c.l.b16 %v1143
        %v1328 = vunpack.c.h.b16 %v1143
        %v1329 = vunpack.c.l.b16 %v1144
        %v1330 = vunpack.c.h.b16 %v1144
        %v1331 = vunpack.c.l.b16 %v1145
        %v1332 = vunpack.c.h.b16 %v1145
        %v1333 = vunpack.c.l.b16 %v1146
        %v1334 = vunpack.c.h.b16 %v1146
        %v1335 = vunpack.c.l.b16 %v1147
        %v1336 = vunpack.c.h.b16 %v1147
        %v1337 = vunpack.c.l.b16 %v1148
        %v1338 = vunpack.c.h.b16 %v1148
        %v1339 = vunpack.c.l.b16 %v1149
        %v1340 = vunpack.c.h.b16 %v1149
        %v1341 = vunpack.c.l.b16 %v1150
        %v1342 = vunpack.c.h.b16 %v1150
        %v1343 = vunpack.c.l.b16 %v1151
        %v1344 = vunpack.c.h.b16 %v1151
        %v1345 = vunpack.c.l.b16 %v1152
        %v1346 = vunpack.c.h.b16 %v1152
        %v1347 = vunpack.c.l.b16 %v1153
        %v1348 = vunpack.c.h.b16 %v1153
        %v1349 = vunpack.c.l.b16 %v1154
        %v1350 = vunpack.c.h.b16 %v1154
        %v1351 = vunpack.c.l.b16 %v1155
        %v1352 = vunpack.c.h.b16 %v1155
        %v1353 = vunpack.c.l.b16 %v1156
        %v1354 = vunpack.c.h.b16 %v1156
        %v1355 = vunpack.c.l.b16 %v1157
        %v1356 = vunpack.c.h.b16 %v1157
        %v1357 = vunpack.c.l.b16 %v1158
        %v1358 = vunpack.c.h.b16 %v1158
        %v1359 = vunpack.c.l.b16 %v1159
        %v1360 = vunpack.c.h.b16 %v1159
        %v1361 = vunpack.c.l.b16 %v1160
        %v1362 = vunpack.c.h.b16 %v1160
        %v1363 = vunpack.c.l.b16 %v1161
        %v1364 = vunpack.c.h.b16 %v1161
        %v1365 = vunpack.c.l.b16 %v1162
        %v1366 = vunpack.c.h.b16 %v1162
        %v1367 = vpack.c.b16 %v1241, %v1239
        %v1368 = vpack.c.b16 %v1242, %v1240
        %v1369 = vpack.c.b16 %v1245, %v1243
        %v1370 = vpack.c.b16 %v1246, %v1244
        %v1371 = vpack.c.b16 %v1249, %v1247
        %v1372 = vpack.c.b16 %v1250, %v1248
        %v1373 = vpack.c.b16 %v1253, %v1251
        %v1374 = vpack.c.b16 %v1254, %v1252
        %v1375 = vpack.c.b16 %v1257, %v1255
        %v1376 = vpack.c.b16 %v1258, %v1256
        %v1377 = vpack.c.b16 %v1261, %v1259
        %v1378 = vpack.c.b16 %v1262, %v1260
        %v1379 = vpack.c.b16 %v1265, %v1263
        %v1380 = vpack.c.b16 %v1266, %v1264
        %v1381 = vpack.c.b16 %v1269, %v1267
        %v1382 = vpack.c.b16 %v1270, %v1268
        %v1383 = vpack.c.b16 %v1273, %v1271
        %v1384 = vpack.c.b16 %v1274, %v1272
        %v1385 = vpack.c.b16 %v1277, %v1275
        %v1386 = vpack.c.b16 %v1278, %v1276
        %v1387 = vpack.c.b16 %v1281, %v1279
        %v1388 = vpack.c.b16 %v1282, %v1280
        %v1389 = vpack.c.b16 %v1285, %v1283
        %v1390 = vpack.c.b16 %v1286, %v1284
        %v1391 = vpack.c.b16 %v1289, %v1287
        %v1392 = vpack.c.b16 %v1290, %v1288
        %v1393 = vpack.c.b16 %v1293, %v1291
        %v1394 = vpack.c.b16 %v1294, %v1292
        %v1395 = vpack.c.b16 %v1297, %v1295
        %v1396 = vpack.c.b16 %v1298, %v1296
        %v1397 = vpack.c.b16 %v1301, %v1299
        %v1398 = vpack.c.b16 %v1302, %v1300
        %v1399 = vpack.c.b16 %v1305, %v1303
        %v1400 = vpack.c.b16 %v1306, %v1304
        %v1401 = vpack.c.b16 %v1309, %v1307
        %v1402 = vpack.c.b16 %v1310, %v1308
        %v1403 = vpack.c.b16 %v1313, %v1311
        %v1404 = vpack.c.b16 %v1314, %v1312
        %v1405 = vpack.c.b16 %v1317, %v1315
        %v1406 = vpack.c.b16 %v1318, %v1316
        %v1407 = vpack.c.b16 %v1321, %v1319
        %v1408 = vpack.c.b16 %v1322, %v1320
        %v1409 = vpack.c.b16 %v1325, %v1323
        %v1410 = vpack.c.b16 %v1326, %v1324
        %v1411 = vpack.c.b16 %v1329, %v1327
        %v1412 = vpack.c.b16 %v1330, %v1328
        %v1413 = vpack.c.b16 %v1333, %v1331
        %v1414 = vpack.c.b16 %v1334, %v1332
        %v1415 = vpack.c.b16 %v1337, %v1335
        %v1416 = vpack.c.b16 %v1338, %v1336
        %v1417 = vpack.c.b16 %v1341, %v1339
        %v1418 = vpack.c.b16 %v1342, %v1340
        %v1419 = vpack.c.b16 %v1345, %v1343
        %v1420 = vpack.c.b16 %v1346, %v1344
        %v1421 = vpack.c.b16 %v1349, %v1347
        %v1422 = vpack.c.b16 %v1350, %v1348
        %v1423 = vpack.c.b16 %v1353, %v1351
        %v1424 = vpack.c.b16 %v1354, %v1352
        %v1425 = vpack.c.b16 %v1357, %v1355
        %v1426 = vpack.c.b16 %v1358, %v1356
        %v1427 = vpack.c.b16 %v1361, %v1359
        %v1428 = vpack.c.b16 %v1362, %v1360
        %v1429 = vpack.c.b16 %v1365, %v1363
        %v1430 = vpack.c.b16 %v1366, %v1364
        %1495 = vmatprep.subr.bf16.mxu0 %v1368
        %1496 = vmatpush1.bf16.msra.mxu0 %v1367
        %1497 = vmatprep.subr.bf16.mxu0 %v1370
        %1498 = vmatpush1.bf16.msra.mxu0 %v1369
        %1499 = vmatprep.subr.bf16.mxu0 %v1372
        %1500 = vmatpush1.bf16.msra.mxu0 %v1371
        %1501 = vmatprep.subr.bf16.mxu0 %v1374
        %1502 = vmatpush1.bf16.msra.mxu0 %v1373
        %1503 = vmatprep.subr.bf16.mxu0 %v1376
        %1504 = vmatpush1.bf16.msra.mxu0 %v1375
        %1505 = vmatprep.subr.bf16.mxu0 %v1378
        %1506 = vmatpush1.bf16.msra.mxu0 %v1377
        %1507 = vmatprep.subr.bf16.mxu0 %v1380
        %1508 = vmatpush1.bf16.msra.mxu0 %v1379
        %1509 = vmatprep.subr.bf16.mxu0 %v1382
        %1510 = vmatpush1.bf16.msra.mxu0 %v1381
        %1511 = vmatprep.subr.bf16.mxu0 %v1384
        %1512 = vmatpush1.bf16.msra.mxu0 %v1383
        %1513 = vmatprep.subr.bf16.mxu0 %v1386
        %1514 = vmatpush1.bf16.msra.mxu0 %v1385
        %1515 = vmatprep.subr.bf16.mxu0 %v1388
        %1516 = vmatpush1.bf16.msra.mxu0 %v1387
        %1517 = vmatprep.subr.bf16.mxu0 %v1390
        %1518 = vmatpush1.bf16.msra.mxu0 %v1389
        %1519 = vmatprep.subr.bf16.mxu0 %v1392
        %1520 = vmatpush1.bf16.msra.mxu0 %v1391
        %1521 = vmatprep.subr.bf16.mxu0 %v1394
        %1522 = vmatpush1.bf16.msra.mxu0 %v1393
        %1523 = vmatprep.subr.bf16.mxu0 %v1396
        %1524 = vmatpush1.bf16.msra.mxu0 %v1395
        %1525 = vmatprep.subr.bf16.mxu0 %v1398
        %1526 = vmatpush1.bf16.msra.mxu0 %v1397
        %1527 = vmatprep.mubr.bf16.mxu0 %v1068
        %1528 = vmatmul.mubr.bf16.gmra.mrb[0].mxu0 %v1067
        %v1529 = vpop.f32.mrb[0].mxu0
        %v1530 = vadd.f32 %v1168, %v1529
        %v1531 = vpop.f32.mrb[0].mxu0
        %v1532 = vadd.f32 %v1172, %v1531
        %v1533 = vpop.f32.mrb[0].mxu0
        %v1534 = vadd.f32 %v1168, %v1533
        %v1535 = vpop.f32.mrb[0].mxu0
        %v1536 = vadd.f32 %v1172, %v1535
        %1537 = vmatprep.mubr.bf16.mxu0 %v1072
        %1538 = vmatmul.mubr.bf16.gmra.mrb[0].mxu0 %v1071
        %v1539 = vpop.f32.mrb[0].mxu0
        %v1540 = vadd.f32 %v1168, %v1539
        %v1541 = vpop.f32.mrb[0].mxu0
        %v1542 = vadd.f32 %v1172, %v1541
        %v1543 = vpop.f32.mrb[0].mxu0
        %v1544 = vadd.f32 %v1168, %v1543
        %v1545 = vpop.f32.mrb[0].mxu0
        %v1546 = vadd.f32 %v1172, %v1545
        %1547 = vmatprep.mubr.bf16.mxu0 %v1076
        %1548 = vmatmul.mubr.bf16.gmra.mrb[0].mxu0 %v1075
        %v1549 = vpop.f32.mrb[0].mxu0
        %v1550 = vadd.f32 %v1168, %v1549
        %v1551 = vpop.f32.mrb[0].mxu0
        %v1552 = vadd.f32 %v1172, %v1551
        %v1553 = vpop.f32.mrb[0].mxu0
        %v1554 = vadd.f32 %v1168, %v1553
        %v1555 = vpop.f32.mrb[0].mxu0
        %v1556 = vadd.f32 %v1172, %v1555
        %1557 = vmatprep.mubr.bf16.mxu0 %v1080
        %1558 = vmatmul.mubr.bf16.gmra.mrb[0].mxu0 %v1079
        %v1559 = vpop.f32.mrb[0].mxu0
        %v1560 = vadd.f32 %v1168, %v1559
        %v1561 = vpop.f32.mrb[0].mxu0
        %v1562 = vadd.f32 %v1172, %v1561
        %v1563 = vpop.f32.mrb[0].mxu0
        %v1564 = vadd.f32 %v1168, %v1563
        %v1565 = vpop.f32.mrb[0].mxu0
        %v1566 = vadd.f32 %v1172, %v1565
        %1567 = vmatprep.mubr.bf16.mxu0 %v1084
        %1568 = vmatmul.mubr.bf16.gmra.mrb[0].mxu0 %v1083
        %v1569 = vpop.f32.mrb[0].mxu0
        %v1570 = vadd.f32 %v1168, %v1569
        %v1571 = vpop.f32.mrb[0].mxu0
        %v1572 = vadd.f32 %v1172, %v1571
        %v1573 = vpop.f32.mrb[0].mxu0
        %v1574 = vadd.f32 %v1168, %v1573
        %v1575 = vpop.f32.mrb[0].mxu0
        %v1576 = vadd.f32 %v1172, %v1575
        %1577 = vmatprep.mubr.bf16.mxu0 %v1088
        %1578 = vmatmul.mubr.bf16.gmra.mrb[0].mxu0 %v1087
        %v1579 = vpop.f32.mrb[0].mxu0
        %v1580 = vadd.f32 %v1168, %v1579
        %v1581 = vpop.f32.mrb[0].mxu0
        %v1582 = vadd.f32 %v1172, %v1581
        %v1583 = vpop.f32.mrb[0].mxu0
        %v1584 = vadd.f32 %v1168, %v1583
        %v1585 = vpop.f32.mrb[0].mxu0
        %v1586 = vadd.f32 %v1172, %v1585
        %1587 = vmatprep.mubr.bf16.mxu0 %v1092
        %1588 = vmatmul.mubr.bf16.gmra.mrb[0].mxu0 %v1091
        %v1589 = vpop.f32.mrb[0].mxu0
        %v1590 = vadd.f32 %v1168, %v1589
        %v1591 = vpop.f32.mrb[0].mxu0
        %v1592 = vadd.f32 %v1172, %v1591
        %v1593 = vpop.f32.mrb[0].mxu0
        %v1594 = vadd.f32 %v1168, %v1593
        %v1595 = vpop.f32.mrb[0].mxu0
        %v1596 = vadd.f32 %v1172, %v1595
        %1597 = vmatprep.mubr.bf16.mxu0 %v1096
        %1598 = vmatmul.mubr.bf16.gmra.mrb[0].mxu0 %v1095
        %v1599 = vpop.f32.mrb[0].mxu0
        %v1600 = vadd.f32 %v1168, %v1599
        %v1601 = vpop.f32.mrb[0].mxu0
        %v1602 = vadd.f32 %v1172, %v1601
        %v1603 = vpop.f32.mrb[0].mxu0
        %v1604 = vadd.f32 %v1168, %v1603
        %v1605 = vpop.f32.mrb[0].mxu0
        %v1606 = vadd.f32 %v1172, %v1605
        %1607 = vdwg.mxu0
        %1608 = vmatprep.subr.bf16.mxu0 %v1400
        %1609 = vmatpush1.bf16.msra.mxu0 %v1399
        %1610 = vmatprep.subr.bf16.mxu0 %v1402
        %1611 = vmatpush1.bf16.msra.mxu0 %v1401
        %1612 = vmatprep.subr.bf16.mxu0 %v1404
        %1613 = vmatpush1.bf16.msra.mxu0 %v1403
        %1614 = vmatprep.subr.bf16.mxu0 %v1406
        %1615 = vmatpush1.bf16.msra.mxu0 %v1405
        %1616 = vmatprep.subr.bf16.mxu0 %v1408
        %1617 = vmatpush1.bf16.msra.mxu0 %v1407
        %1618 = vmatprep.subr.bf16.mxu0 %v1410
        %1619 = vmatpush1.bf16.msra.mxu0 %v1409
        %1620 = vmatprep.subr.bf16.mxu0 %v1412
        %1621 = vmatpush1.bf16.msra.mxu0 %v1411
        %1622 = vmatprep.subr.bf16.mxu0 %v1414
        %1623 = vmatpush1.bf16.msra.mxu0 %v1413
        %1624 = vmatprep.subr.bf16.mxu0 %v1416
        %1625 = vmatpush1.bf16.msra.mxu0 %v1415
        %1626 = vmatprep.subr.bf16.mxu0 %v1418
        %1627 = vmatpush1.bf16.msra.mxu0 %v1417
        %1628 = vmatprep.subr.bf16.mxu0 %v1420
        %1629 = vmatpush1.bf16.msra.mxu0 %v1419
        %1630 = vmatprep.subr.bf16.mxu0 %v1422
        %1631 = vmatpush1.bf16.msra.mxu0 %v1421
        %1632 = vmatprep.subr.bf16.mxu0 %v1424
        %1633 = vmatpush1.bf16.msra.mxu0 %v1423
        %1634 = vmatprep.subr.bf16.mxu0 %v1426
        %1635 = vmatpush1.bf16.msra.mxu0 %v1425
        %1636 = vmatprep.subr.bf16.mxu0 %v1428
        %1637 = vmatpush1.bf16.msra.mxu0 %v1427
        %1638 = vmatprep.subr.bf16.mxu0 %v1430
        %1639 = vmatpush1.bf16.msra.mxu0 %v1429
        %1640 = vmatprep.mubr.bf16.mxu0 %v1070
        %1641 = vmatmul.mubr.bf16.gmra.mrb[0].mxu0 %v1069
        %v1642 = vpop.f32.mrb[0].mxu0
        %v1643 = vadd.f32 %v1530, %v1642
        %v1644 = vpop.f32.mrb[0].mxu0
        %v1645 = vadd.f32 %v1532, %v1644
        %v1646 = vpop.f32.mrb[0].mxu0
        %v1647 = vadd.f32 %v1534, %v1646
        %v1648 = vpop.f32.mrb[0].mxu0
        %v1649 = vadd.f32 %v1536, %v1648
        %1650 = vmatprep.mubr.bf16.mxu0 %v1074
        %1651 = vmatmul.mubr.bf16.gmra.mrb[0].mxu0 %v1073
        %v1652 = vpop.f32.mrb[0].mxu0
        %v1653 = vadd.f32 %v1540, %v1652
        %v1654 = vpop.f32.mrb[0].mxu0
        %v1655 = vadd.f32 %v1542, %v1654
        %v1656 = vpop.f32.mrb[0].mxu0
        %v1657 = vadd.f32 %v1544, %v1656
        %v1658 = vpop.f32.mrb[0].mxu0
        %v1659 = vadd.f32 %v1546, %v1658
        %1660 = vmatprep.mubr.bf16.mxu0 %v1078
        %1661 = vmatmul.mubr.bf16.gmra.mrb[0].mxu0 %v1077
        %v1662 = vpop.f32.mrb[0].mxu0
        %v1663 = vadd.f32 %v1550, %v1662
        %v1664 = vpop.f32.mrb[0].mxu0
        %v1665 = vadd.f32 %v1552, %v1664
        %v1666 = vpop.f32.mrb[0].mxu0
        %v1667 = vadd.f32 %v1554, %v1666
        %v1668 = vpop.f32.mrb[0].mxu0
        %v1669 = vadd.f32 %v1556, %v1668
        %1670 = vmatprep.mubr.bf16.mxu0 %v1082
        %1671 = vmatmul.mubr.bf16.gmra.mrb[0].mxu0 %v1081
        %v1672 = vpop.f32.mrb[0].mxu0
        %v1673 = vadd.f32 %v1560, %v1672
        %v1674 = vpop.f32.mrb[0].mxu0
        %v1675 = vadd.f32 %v1562, %v1674
        %v1676 = vpop.f32.mrb[0].mxu0
        %v1677 = vadd.f32 %v1564, %v1676
        %v1678 = vpop.f32.mrb[0].mxu0
        %v1679 = vadd.f32 %v1566, %v1678
        %1680 = vmatprep.mubr.bf16.mxu0 %v1086
        %1681 = vmatmul.mubr.bf16.gmra.mrb[0].mxu0 %v1085
        %v1682 = vpop.f32.mrb[0].mxu0
        %v1683 = vadd.f32 %v1570, %v1682
        %v1684 = vpop.f32.mrb[0].mxu0
        %v1685 = vadd.f32 %v1572, %v1684
        %v1686 = vpop.f32.mrb[0].mxu0
        %v1687 = vadd.f32 %v1574, %v1686
        %v1688 = vpop.f32.mrb[0].mxu0
        %v1689 = vadd.f32 %v1576, %v1688
        %1690 = vmatprep.mubr.bf16.mxu0 %v1090
        %1691 = vmatmul.mubr.bf16.gmra.mrb[0].mxu0 %v1089
        %v1692 = vpop.f32.mrb[0].mxu0
        %v1693 = vadd.f32 %v1580, %v1692
        %v1694 = vpop.f32.mrb[0].mxu0
        %v1695 = vadd.f32 %v1582, %v1694
        %v1696 = vpop.f32.mrb[0].mxu0
        %v1697 = vadd.f32 %v1584, %v1696
        %v1698 = vpop.f32.mrb[0].mxu0
        %v1699 = vadd.f32 %v1586, %v1698
        %1700 = vmatprep.mubr.bf16.mxu0 %v1094
        %1701 = vmatmul.mubr.bf16.gmra.mrb[0].mxu0 %v1093
        %v1702 = vpop.f32.mrb[0].mxu0
        %v1703 = vadd.f32 %v1590, %v1702
        %v1704 = vpop.f32.mrb[0].mxu0
        %v1705 = vadd.f32 %v1592, %v1704
        %v1706 = vpop.f32.mrb[0].mxu0
        %v1707 = vadd.f32 %v1594, %v1706
        %v1708 = vpop.f32.mrb[0].mxu0
        %v1709 = vadd.f32 %v1596, %v1708
        %1710 = vmatprep.mubr.bf16.mxu0 %v1098
        %1711 = vmatmul.mubr.bf16.gmra.mrb[0].mxu0 %v1097
        %v1712 = vpop.f32.mrb[0].mxu0
        %v1713 = vadd.f32 %v1600, %v1712
        %v1714 = vpop.f32.mrb[0].mxu0
        %v1715 = vadd.f32 %v1602, %v1714
        %v1716 = vpop.f32.mrb[0].mxu0
        %v1717 = vadd.f32 %v1604, %v1716
        %v1718 = vpop.f32.mrb[0].mxu0
        %v1719 = vadd.f32 %v1606, %v1718
        %1720 = vdwg.mxu0
        %1721 = vst [vmem:[%s272] sm:$0xff] %v1643
        %1722 = vst [vmem:[%s272 + $0x8] sm:$0xff] %v1645
        %1723 = vst [vmem:[%s272 + $0x10] sm:$0xff] %v1647
        %1724 = vst [vmem:[%s272 + $0x18] sm:$0xff] %v1649
        %1725 = vst [vmem:[%s272 + $0x20] sm:$0xff] %v1653
        %1726 = vst [vmem:[%s272 + $0x28] sm:$0xff] %v1655
        %1727 = vst [vmem:[%s272 + $0x30] sm:$0xff] %v1657
        %1728 = vst [vmem:[%s272 + $0x38] sm:$0xff] %v1659
        %1729 = vst [vmem:[%s272 + $0x40] sm:$0xff] %v1663
        %1730 = vst [vmem:[%s272 + $0x48] sm:$0xff] %v1665
        %1731 = vst [vmem:[%s272 + $0x50] sm:$0xff] %v1667
        %1732 = vst [vmem:[%s272 + $0x58] sm:$0xff] %v1669
        %1733 = vst [vmem:[%s272 + $0x60] sm:$0xff] %v1673
        %1734 = vst [vmem:[%s272 + $0x68] sm:$0xff] %v1675
        %1735 = vst [vmem:[%s272 + $0x70] sm:$0xff] %v1677
        %1736 = vst [vmem:[%s272 + $0x78] sm:$0xff] %v1679
        %1737 = vst [vmem:[%s272 + $0x80] sm:$0xff] %v1683
        %1738 = vst [vmem:[%s272 + $0x88] sm:$0xff] %v1685
        %1739 = vst [vmem:[%s272 + $0x90] sm:$0xff] %v1687
        %1740 = vst [vmem:[%s272 + $0x98] sm:$0xff] %v1689
        %1741 = vst [vmem:[%s272 + $0xa0] sm:$0xff] %v1693
        %1742 = vst [vmem:[%s272 + $0xa8] sm:$0xff] %v1695
        %1743 = vst [vmem:[%s272 + $0xb0] sm:$0xff] %v1697
        %1744 = vst [vmem:[%s272 + $0xb8] sm:$0xff] %v1699
        %1745 = vst [vmem:[%s272 + $0xc0] sm:$0xff] %v1703
        %1746 = vst [vmem:[%s272 + $0xc8] sm:$0xff] %v1705
        %1747 = vst [vmem:[%s272 + $0xd0] sm:$0xff] %v1707
        %1748 = vst [vmem:[%s272 + $0xd8] sm:$0xff] %v1709
        %1749 = vst [vmem:[%s272 + $0xe0] sm:$0xff] %v1713
        %1750 = vst [vmem:[%s272 + $0xe8] sm:$0xff] %v1715
        %1751 = vst [vmem:[%s272 + $0xf0] sm:$0xff] %v1717
        %1752 = vst [vmem:[%s272 + $0xf8] sm:$0xff] %v1719
        %s1753 = sand.u32 %s141, 1
        %s1754 = scalar_lea.sflag [#allocation4], %s1753
        %s1755 = sand.u32 %s141, 1
        %s1756 = smul.addr %s1755, 256
        %s1757 = scalar_lea.vmem [#allocation8], %s1756
        // Predicated region
        $region53: #{tpu_custom_call.1} parent=39 // pred_check
          %p1758 = pneg %p151
        $region54: #{tpu_custom_call.1} parent=39 // pred_check_branch
          %1760 = sbr.rel (%p1758) target = $region56
        $region55: #{tpu_custom_call.1} parent=39 // pred_region
          %s1761 = smul.u32 16, %s23
          %s1763 = ssub.s32 4096, 4096
          %1764 = vsyncadd %s1754, %s1763
          %s1765 = smul.addr %s1761, 2
          %s1766 = smul.addr %s1765, 128
          %s1767 = scalar_lea.hbm %s5, %s1766
          %s1768 = sshll.u32 %s1757, 4
          %s1769 = int_to_ptr.vmem [resolvable:$true] %s1768
          %1774 = dma.vmem_to_hbm [thread:$0]  %s1769, 4096, %s1767, %s1754, 256, 256, 16
        $region56: #{tpu_custom_call.1} parent=39 // pred_fallthru
          _
      $region40: #{tpu_custom_call.1} parent=5 // pred_fallthru
        _
      %p1775 = scmp.le.s32.totalorder 2, %s18
      // Predicated region
      $region57: #{tpu_custom_call.1} parent=5 // pred_check
        %p1776 = pneg %p1775
      $region58: #{tpu_custom_call.1} parent=5 // pred_check_branch
        %1778 = sbr.rel (%p1776) target = $region60
      $region59: #{tpu_custom_call.1} parent=5 // pred_region
        %s1779 = ssub.s32 %s18, 2
        // Predicated region
        $region61: #{tpu_custom_call.1} parent=59 // pred_check
          %p1780 = pneg %p157
        $region62: #{tpu_custom_call.1} parent=59 // pred_check_branch
          %1782 = sbr.rel (%p1780) target = $region64
        $region63: #{tpu_custom_call.1} parent=59 // pred_region
          %s1783 = sand.u32 %s142, 1
          %s1784 = scalar_lea.sflag [#allocation4], %s1783
          %s1785 = sand.u32 %s142, 1
          %s1786 = smul.addr %s1785, 256
          %s1787 = scalar_lea.vmem [#allocation8], %s1786
          %1788 = dma.done %s1784, 4096
        $region64: #{tpu_custom_call.1} parent=59 // pred_fallthru
          _
      $region60: #{tpu_custom_call.1} parent=5 // pred_fallthru
        _
    $region6: #{tpu_custom_call.1} parent=1 // loop_footer
      %s22 = sadd.s32 1, %s18
    $region7: #{tpu_custom_call.1} parent=1 // loop_footer_branch
      %17 = sbr.rel target = $region3
    $region8: #{tpu_custom_call.1} parent=1 // loop_exit
      _
    %1789 = vsyncpa [#allocation3], 1
    %s1790 = scalar_lea.sflag [#allocation3], 1
    %1791 = vsyncpa %s1790, 1
    %1792 = vsyncpa [#allocation6], 1
    %1793 = vsyncpa [#allocation4], 1
    %s1794 = scalar_lea.sflag [#allocation4], 1
    %1795 = vsyncpa %s1794, 1

</llo_original>
